<compile_context>
chip_gen: v5e
topology: v5e:2x2
jax: 0.10.0
libtpu: 0.0.40
codegen_flags: <defaults>
</compile_context>

<pallas_src>
import functools

import jax
import jax.numpy as jnp
import numpy as np
from jax import lax
from jax.experimental import pallas as pl
from jax.experimental.pallas import tpu as pltpu

F32 = jnp.float32
BF16 = jnp.bfloat16


# ----------------------------------------------------------------------------
# small helpers
# ----------------------------------------------------------------------------
def _round_up(x, m):
    return ((x + m - 1) // m) * m


def _plan_rows(n, tile, sub_quantum=8, lane_tiled=False):
    """Pick (padded_rows, tile_rows) for a 1-D row grid."""
    nq = _round_up(max(int(n), 1), sub_quantum)
    tile = max(sub_quantum, int(tile))
    if tile >= nq:
        return nq, nq
    t = _round_up(tile, 128 if lane_tiled else sub_quantum)
    if t >= nq:
        return nq, nq
    return _round_up(nq, t), t


def _pad_rows(x, n_pad, value=0):
    pad = n_pad - x.shape[0]
    if pad <= 0:
        return x
    filler = jnp.full((pad,) + x.shape[1:], value, x.dtype)
    return jnp.concatenate([x, filler], axis=0)


def _pack_gv_weights(p):
    """Block-diagonal (x/y/z fused) GVLinear weights."""
    eye3 = jnp.eye(3, dtype=F32)
    return (jnp.kron(eye3, p["wv1"]), jnp.kron(eye3, p["wv2"]),
            p["wsn"], p["wss"], p["wg"], p["bg"])


def _head_mask(num_heads, channels):
    per = channels // num_heads
    head_of = jnp.arange(channels) // per
    return (jnp.arange(num_heads)[:, None] == head_of[None, :]).astype(F32)


def _gv_apply(s, v3, wv1_3, wv2_3, wsn, wss, wg, bg):
    """Fused GVLinear on a packed (rows, 3*in_v) [x|y|z] vector slab."""
    dot = lambda a, b: jnp.dot(a, b, preferred_element_type=F32)
    dh = wsn.shape[0]
    inter = dot(v3, wv1_3)                          # (R, 3*dh), layout [x|y|z]
    ix, iy, iz = inter[:, :dh], inter[:, dh:2 * dh], inter[:, 2 * dh:]
    norm = jnp.sqrt(ix * ix + iy * iy + iz * iz)
    out_s = dot(norm, wsn) + dot(s, wss)
    gate = jax.nn.sigmoid(dot(out_s, wg) + bg)
    out_v3 = dot(inter, wv2_3)                      # (R, 3*out_v)
    gate3 = jnp.concatenate([gate, gate, gate], axis=-1)
    return out_s, gate3 * out_v3


# ----------------------------------------------------------------------------
# Kernel 1: fused q/k/v GVLinear projections (row-tiled, parallel)
# ----------------------------------------------------------------------------
def _qkv_kernel(feat_ref, *refs, HS):
    qk_ref, v_ref = refs[-2], refs[-1]
    wq, wk, wv = refs[0:6], refs[6:12], refs[12:18]
    f = feat_ref[...]
    s, v3 = f[:, :HS], f[:, HS:]
    q_s, q_v3 = _gv_apply(s, v3, *[r[...] for r in wq])
    k_s, k_v3 = _gv_apply(s, v3, *[r[...] for r in wk])
    o_s, o_v3 = _gv_apply(s, v3, *[r[...] for r in wv])
    qk_ref[...] = jnp.concatenate([q_s, q_v3, k_s, k_v3], axis=-1).astype(qk_ref.dtype)
    v_ref[...] = jnp.concatenate([o_s, o_v3], axis=-1).astype(v_ref.dtype)


# ----------------------------------------------------------------------------
# Kernel 2: attention logits (AttentionBias fused + qk), pair-tiled, parallel
# ----------------------------------------------------------------------------
def _alpha_kernel(idx_ref, pos_ref, tef_ref, hqk_ref,
                  off_ref, wvexp_ref,
                  bwv1_ref, bwv2_ref, bwsn_ref, bwss_ref, bwg_ref, bbg_ref,
                  hmks_ref, hmkv_ref,
                  alpha_ref, *, coeff, nH, KS, KV):
    one = jnp.ones((), BF16)
    zero = jnp.zeros((), BF16)

    idx = idx_ref[...]                                    # (TP, 2) int32
    tp = idx.shape[0]
    n_pad = hqk_ref.shape[0]
    lane_iota = lax.broadcasted_iota(jnp.int32, (tp, n_pad), 1)
    oh_i = jnp.where(idx[:, 0:1] == lane_iota, one, zero)  # (TP, N) bf16
    oh_j = jnp.where(idx[:, 1:2] == lane_iota, one, zero)

    slab = hqk_ref[...]                                   # (N, 2*(KS+3KV)) bf16
    wq = KS + 3 * KV
    q = jnp.dot(oh_i, slab, preferred_element_type=F32)[:, :wq]
    k = jnp.dot(oh_j, slab, preferred_element_type=F32)[:, wq:]

    prod_s = q[:, :KS] * k[:, :KS]
    qv, kv = q[:, KS:], k[:, KS:]
    prod_v = (qv[:, :KV] * kv[:, :KV]
              + qv[:, KV:2 * KV] * kv[:, KV:2 * KV]
              + qv[:, 2 * KV:] * kv[:, 2 * KV:])
    qk_s = jnp.dot(prod_s, hmks_ref[...], preferred_element_type=F32)  # (TP, nH)
    qk_v = jnp.dot(prod_v, hmkv_ref[...], preferred_element_type=F32)

    # attention bias: Gaussian smearing + vector expansion + GVLinear (fused)
    pos = pos_ref[...]                                    # (TP, 8) packed positions
    vx = pos[:, 0:1] - pos[:, 3:4]
    vy = pos[:, 1:2] - pos[:, 4:5]
    vz = pos[:, 2:3] - pos[:, 5:6]
    dist = jnp.sqrt(vx * vx + vy * vy + vz * vz)
    delta = dist - off_ref[...]
    dist_feat = jnp.exp(coeff * delta * delta)
    sca_feat = jnp.concatenate([dist_feat, tef_ref[...]], axis=-1)
    inv = 1.0 / (dist + 1e-7)
    w = wvexp_ref[...]
    vfeat3 = jnp.concatenate([(vx * inv) * w, (vy * inv) * w, (vz * inv) * w],
                             axis=-1)
    b_s, b_v3 = _gv_apply(sca_feat, vfeat3, bwv1_ref[...], bwv2_ref[...],
                          bwsn_ref[...], bwss_ref[...], bwg_ref[...],
                          bbg_ref[...])
    bias_v = (b_v3[:, :nH] ** 2 + b_v3[:, nH:2 * nH] ** 2
              + b_v3[:, 2 * nH:] ** 2)

    alpha_ref[...] = jnp.concatenate([b_s + qk_s, bias_v + qk_v], axis=-1)


# ----------------------------------------------------------------------------
# Kernel 3: segment-softmax scatter + residual + LayerNorms (pair-tiled,
#           N-resident accumulator, "arbitrary" grid axis)
# ----------------------------------------------------------------------------
def _attn_out_kernel(idx_ref, idxrow_ref, alpha_ref, segmax_ref, hv_ref, res_ref,
                     hmhs_ref, hmhv_ref, gs_ref, bs_ref, gv_ref, bv_ref,
                     out_ref, acc_ref, *, nH, HS, HV):
    @pl.when(pl.program_id(0) == 0)
    def _():
        acc_ref[...] = jnp.zeros_like(acc_ref)

    one = jnp.ones((), BF16)
    zero = jnp.zeros((), BF16)

    idx = idx_ref[...]                                    # (TP, 2) int32
    tp = idx.shape[0]
    n_pad = hv_ref.shape[0]
    lane_iota = lax.broadcasted_iota(jnp.int32, (tp, n_pad), 1)
    oh_j = jnp.where(idx[:, 1:2] == lane_iota, one, zero)            # (TP, N)
    sub_iota = lax.broadcasted_iota(jnp.int32, (n_pad, tp), 0)
    oh_i_t = jnp.where(idxrow_ref[...] == sub_iota, one, zero)       # (N, TP)

    e = jnp.exp(alpha_ref[...] - segmax_ref[...])                    # (TP, 2nH)
    vj = jnp.dot(oh_j, hv_ref[...], preferred_element_type=F32)      # (TP, HS+3HV)
    w_s = jnp.dot(e[:, :nH], hmhs_ref[...], preferred_element_type=F32)
    w_v = jnp.dot(e[:, nH:], hmhv_ref[...], preferred_element_type=F32)
    w_full = jnp.concatenate([w_s, w_v, w_v, w_v], axis=-1)
    contrib = jnp.concatenate([w_full * vj, e], axis=-1).astype(BF16)
    acc_ref[...] += jnp.dot(oh_i_t, contrib, preferred_element_type=F32)

    @pl.when(pl.program_id(0) == pl.num_programs(0) - 1)
    def _():
        C = HS + 3 * HV
        acc = acc_ref[...]
        num, z = acc[:, :C], acc[:, C:]
        z_s = jnp.dot(z[:, :nH], hmhs_ref[...], preferred_element_type=F32)
        z_v = jnp.dot(z[:, nH:], hmhv_ref[...], preferred_element_type=F32)
        z_full = jnp.concatenate([z_s, z_v, z_v, z_v], axis=-1)
        safe = jnp.where(z_full > 0.0, z_full, 1.0)
        updated = res_ref[...] + jnp.where(z_full > 0.0, num / safe, 0.0)

        new_s, new_v = updated[:, :HS], updated[:, HS:]
        m_s = jnp.mean(new_s, axis=1, keepdims=True)
        v_s = jnp.mean((new_s - m_s) ** 2, axis=1, keepdims=True)
        ln_s = (new_s - m_s) / jnp.sqrt(v_s + 1e-5) * gs_ref[...] + bs_ref[...]
        m_v = jnp.mean(new_v, axis=1, keepdims=True)
        v_v = jnp.mean((new_v - m_v) ** 2, axis=1, keepdims=True)
        ln_v = (new_v - m_v) / jnp.sqrt(v_v + 1e-5) * gv_ref[...] + bv_ref[...]
        out_ref[...] = jnp.concatenate([ln_s, ln_v], axis=-1)


# ----------------------------------------------------------------------------
# forward wrapper
# ----------------------------------------------------------------------------
def attention_edges_forward(params, edge_attr, edge_index, pos_compose,
                            index_real_cps_edge_for_atten, tri_edge_index,
                            tri_edge_feat, num_heads, *,
                            row_tile=512, pair_tile=512):
    del edge_index  # unpacked but unused in the reference forward
    scalar, vector = edge_attr              # (N, HS), (N, HV, 3)
    N, HS = scalar.shape
    HV = vector.shape[1]
    nH = num_heads

    q_p, k_p, v_p = params["q_lin"], params["k_lin"], params["v_lin"]
    KS = q_p["wsn"].shape[1]
    KV = q_p["wv2"].shape[1]
    cval = HS + 3 * HV
    cqk = 2 * (KS + 3 * KV)

    def full(a):
        return pl.BlockSpec(a.shape, lambda i: (0,) * a.ndim)

    # --- fused q/k/v GVLinear (kernel 1) -------------------------------------
    n_pad, tn = _plan_rows(N, row_tile, sub_quantum=16)
    feat = jnp.concatenate(
        [scalar, vector[..., 0], vector[..., 1], vector[..., 2]], axis=-1)
    feat = _pad_rows(feat.astype(F32), n_pad)             # (N_pad, HS+3HV)
    w_all = _pack_gv_weights(q_p) + _pack_gv_weights(k_p) + _pack_gv_weights(v_p)

    qk_slab, v_slab = pl.pallas_call(
        functools.partial(_qkv_kernel, HS=HS),
        grid=(n_pad // tn,),
        in_specs=[pl.BlockSpec((tn, cval), lambda i: (i, 0))]
                 + [full(w) for w in w_all],
        out_specs=(pl.BlockSpec((tn, cqk), lambda i: (i, 0)),
                   pl.BlockSpec((tn, cval), lambda i: (i, 0))),
        out_shape=(jax.ShapeDtypeStruct((n_pad, cqk), BF16),
                   jax.ShapeDtypeStruct((n_pad, cval), BF16)),
        compiler_params=pltpu.CompilerParams(dimension_semantics=("parallel",)),
    )(feat, *w_all)

    # --- attention logits (kernel 2) -----------------------------------------
    ab = params["atten_bias"]
    node_a, node_b = tri_edge_index
    pos_a = pos_compose[node_a].astype(F32)               # glue gather (tiny)
    pos_b = pos_compose[node_b].astype(F32)
    P = pos_a.shape[0]
    p_pad, tp = _plan_rows(P, pair_tile, sub_quantum=8, lane_tiled=True)
    pos_pair = _pad_rows(jnp.concatenate(
        [pos_a, pos_b, jnp.zeros((P, 2), F32)], axis=-1), p_pad)     # (P_pad, 8)
    tef = _pad_rows(tri_edge_feat.astype(F32), p_pad)

    idx_i, idx_j = index_real_cps_edge_for_atten
    idx_cols = _pad_rows(jnp.stack([idx_i.astype(jnp.int32),
                                    idx_j.astype(jnp.int32)], axis=-1),
                         p_pad, value=-1)                 # (P_pad, 2)
    idx_i_pad = idx_cols[:, 0]
    idx_row = idx_i_pad[None, :]                          # (1, P_pad)

    hm_ks_t = _head_mask(nH, KS).T                        # (KS, nH)
    hm_kv_t = _head_mask(nH, KV).T                        # (KV, nH)
    bw = _pack_gv_weights(ab["gvlinear"])

    alpha = pl.pallas_call(
        functools.partial(_alpha_kernel, coeff=float(ab["coeff"]),
                          nH=nH, KS=KS, KV=KV),
        grid=(p_pad // tp,),
        in_specs=[
            pl.BlockSpec((tp, 2), lambda p: (p, 0)),
            pl.BlockSpec((tp, 8), lambda p: (p, 0)),
            pl.BlockSpec((tp, tef.shape[1]), lambda p: (p, 0)),
            full(qk_slab), full(ab["offset"]), full(ab["w_vexp"]),
        ] + [full(w) for w in bw] + [full(hm_ks_t), full(hm_kv_t)],
        out_specs=pl.BlockSpec((tp, 2 * nH), lambda p: (p, 0)),
        out_shape=jax.ShapeDtypeStruct((p_pad, 2 * nH), F32),
        compiler_params=pltpu.CompilerParams(dimension_semantics=("parallel",)),
    )(idx_cols, pos_pair, tef, qk_slab, ab["offset"], ab["w_vexp"],
      *bw, hm_ks_t, hm_kv_t)

    # segment max for the scatter-softmax (plain-JAX glue, per review guidance)
    idx_seg = jnp.where(idx_i_pad >= 0, idx_i_pad, 0)
    seg_max = jax.ops.segment_max(alpha, idx_seg, num_segments=n_pad)
    segmax_i = seg_max[idx_seg]                           # (P_pad, 2nH)

    # --- softmax-weighted scatter + residual + LayerNorms (kernel 3) ---------
    hm_hs = _head_mask(nH, HS)
    hm_hv = _head_mask(nH, HV)
    ln = params["layernorm"]
    ln_gs = ln["gamma_s"].reshape(1, HS)
    ln_bs = ln["beta_s"].reshape(1, HS)
    ln_gv = ln["gamma_v"].reshape(1, 3 * HV)              # component-major [x|y|z]
    ln_bv = ln["beta_v"].reshape(1, 3 * HV)

    out_slab = pl.pallas_call(
        functools.partial(_attn_out_kernel, nH=nH, HS=HS, HV=HV),
        grid=(p_pad // tp,),
        in_specs=[
            pl.BlockSpec((tp, 2), lambda p: (p, 0)),
            pl.BlockSpec((1, tp), lambda p: (0, p)),
            pl.BlockSpec((tp, 2 * nH), lambda p: (p, 0)),
            pl.BlockSpec((tp, 2 * nH), lambda p: (p, 0)),
            full(v_slab), full(feat), full(hm_hs), full(hm_hv),
            full(ln_gs), full(ln_bs), full(ln_gv), full(ln_bv),
        ],
        out_specs=pl.BlockSpec((n_pad, cval), lambda p: (0, 0)),
        out_shape=jax.ShapeDtypeStruct((n_pad, cval), F32),
        scratch_shapes=[pltpu.VMEM((n_pad, cval + 2 * nH), F32)],
        compiler_params=pltpu.CompilerParams(dimension_semantics=("arbitrary",)),
    )(idx_cols, idx_row, alpha, segmax_i, v_slab, feat,
      hm_hs, hm_hv, ln_gs, ln_bs, ln_gv, ln_bv)

    out_sca = out_slab[:N, :HS]
    ov = out_slab[:N, HS:]
    out_vec = jnp.stack([ov[:, :HV], ov[:, HV:2 * HV], ov[:, 2 * HV:]], axis=-1)
    return out_sca, out_vec


# ----------------------------------------------------------------------------
# parameter init
# ----------------------------------------------------------------------------
def init_gvlinear_params(key, in_s, in_v, out_s, out_v, scale=0.2):
    dim_hid = max(in_v, out_v)
    k = jax.random.split(key, 6)
    return dict(
        wv1=scale * jax.random.normal(k[0], (in_v, dim_hid), F32),
        wv2=scale * jax.random.normal(k[1], (dim_hid, out_v), F32),
        wsn=scale * jax.random.normal(k[2], (dim_hid, out_s), F32),
        wss=scale * jax.random.normal(k[3], (in_s, out_s), F32),
        wg=scale * jax.random.normal(k[4], (out_s, out_v), F32),
        bg=scale * jax.random.normal(k[5], (1, out_v), F32),
    )


# ----------------------------------------------------------------------------
# Pure-JAX reference (mirrors the PyTorch forward) for a correctness check
# ----------------------------------------------------------------------------
def ref_gvlinear(scalar, vec, p):
    inter = jnp.einsum("ncd,ch->nhd", vec, p["wv1"])
    norm = jnp.linalg.norm(inter, axis=-1)
    out_s = norm @ p["wsn"] + scalar @ p["wss"]
    out_v = jnp.einsum("nhd,ho->nod", inter, p["wv2"])
    gate = jax.nn.sigmoid(out_s @ p["wg"] + p["bg"])
    return out_s, gate[..., None] * out_v


def ref_forward(params, edge_attr, pos_compose, idx_i, idx_j,
                tri_edge_index, tri_edge_feat, num_heads):
    scalar, vector = edge_attr
    N, HS = scalar.shape
    nH = num_heads
    hq_s, hq_v = ref_gvlinear(scalar, vector, params["q_lin"])
    hk_s, hk_v = ref_gvlinear(scalar, vector, params["k_lin"])
    hv_s, hv_v = ref_gvlinear(scalar, vector, params["v_lin"])
    hq = (hq_s.reshape(N, nH, -1), hq_v.reshape(N, nH, -1, 3))
    hk = (hk_s.reshape(N, nH, -1), hk_v.reshape(N, nH, -1, 3))
    hvv = (hv_s.reshape(N, nH, -1), hv_v.reshape(N, nH, -1, 3))

    ab = params["atten_bias"]
    node_a, node_b = tri_edge_index
    vec_ab = pos_compose[node_a] - pos_compose[node_b]
    dist = jnp.linalg.norm(vec_ab, axis=-1, keepdims=True)
    dist_feat = jnp.exp(ab["coeff"] * (dist - ab["offset"]) ** 2)
    sca_feat = jnp.concatenate([dist_feat, tri_edge_feat], axis=-1)
    vnorm = vec_ab / (dist + 1e-7)
    vec_feat = vnorm[:, None, :] * ab["w_vexp"][0][None, :, None]
    b_s, b_v = ref_gvlinear(sca_feat, vec_feat, ab["gvlinear"])
    bias_vec = (b_v * b_v).sum(-1)

    q_i = (hq[0][idx_i], hq[1][idx_i])
    k_j = (hk[0][idx_j], hk[1][idx_j])
    qk_s = (q_i[0] * k_j[0]).sum(-1)
    qk_v = (q_i[1] * k_j[1]).sum(-1).sum(-1)
    alpha_s = b_s + qk_s
    alpha_v = bias_vec + qk_v

    def seg_softmax(a, idx, n):
        seg_max = jax.ops.segment_max(a, idx, num_segments=n)
        e = jnp.exp(a - seg_max[idx])
        seg_sum = jax.ops.segment_sum(e, idx, num_segments=n)
        return e / seg_sum[idx]

    a_s = seg_softmax(alpha_s, idx_i, N)
    a_v = seg_softmax(alpha_v, idx_i, N)
    v_j = (hvv[0][idx_j], hvv[1][idx_j])
    P = idx_i.shape[0]
    out_s = jax.ops.segment_sum((a_s[..., None] * v_j[0]).reshape(P, -1),
                                idx_i, num_segments=N)
    out_v = jax.ops.segment_sum((a_v[..., None, None] * v_j[1]).reshape(P, -1, 3),
                                idx_i, num_segments=N)
    new_s = scalar + out_s
    new_v = vector + out_v

    ln = params["layernorm"]

    def layernorm(x, gamma, beta, axes):
        mean = x.mean(axes, keepdims=True)
        var = ((x - mean) ** 2).mean(axes, keepdims=True)
        return (x - mean) / jnp.sqrt(var + 1e-5) * gamma + beta

    out_sca = layernorm(new_s, ln["gamma_s"][0], ln["beta_s"][0], (-1,))
    out_vec = layernorm(new_v, ln["gamma_v"].T, ln["beta_v"].T, (-2, -1))
    return out_sca, out_vec


# ----------------------------------------------------------------------------
if __name__ == "__main__":
    num_heads = 4
    HS, HV = 16, 8          # hidden_channels
    KS, KV = 8, 8           # key_channels
    num_edge_types = 3
    N = 24                  # number of edges (rows of edge_attr)
    M = 32                  # number of compose nodes (pos_compose)
    P = 200                 # number of attention pairs / tri-edges
    G = HS - num_edge_types

    key = jax.random.PRNGKey(0)
    keys = jax.random.split(key, 20)

    params = {
        "q_lin": init_gvlinear_params(keys[0], HS, HV, KS, KV),
        "k_lin": init_gvlinear_params(keys[1], HS, HV, KS, KV),
        "v_lin": init_gvlinear_params(keys[2], HS, HV, HS, HV),
        "atten_bias": {
            "offset": jnp.linspace(0.0, 10.0, G, dtype=F32)[None, :],
            "coeff": float(-0.5 / (10.0 / (G - 1)) ** 2),
            "w_vexp": 0.2 * jax.random.normal(keys[3], (1, HV), F32),
            "gvlinear": init_gvlinear_params(keys[4], HS, HV, num_heads, num_heads),
        },
        "layernorm": {
            "gamma_s": 1.0 + 0.1 * jax.random.normal(keys[13], (1, HS), F32),
            "beta_s": 0.1 * jax.random.normal(keys[14], (1, HS), F32),
            "gamma_v": 1.0 + 0.1 * jax.random.normal(keys[15], (3, HV), F32),
            "beta_v": 0.1 * jax.random.normal(keys[16], (3, HV), F32),
        },
    }

    scalar = jax.random.normal(keys[5], (N, HS), F32)
    vector = jax.random.normal(keys[6], (N, HV, 3), F32)
    edge_attr = (scalar, vector)
    edge_index = jax.random.randint(keys[7], (2, N), 0, M)
    pos_compose = 3.0 * jax.random.normal(keys[8], (M, 3), F32)
    idx_i = jax.random.randint(keys[9], (P,), 0, N)
    idx_j = jax.random.randint(keys[10], (P,), 0, N)
    index_real_cps_edge_for_atten = (idx_i, idx_j)
    tri_edge_index = jax.random.randint(keys[11], (2, P), 0, M)
    tri_edge_feat = jax.random.normal(keys[12], (P, num_edge_types), F32)

    # small tiles to exercise the multi-tile / padded grid paths
    out_sca, out_vec = attention_edges_forward(
        params, edge_attr, edge_index, pos_compose,
        index_real_cps_edge_for_atten, tri_edge_index, tri_edge_feat,
        num_heads, row_tile=16, pair_tile=128)
    out_sca = jax.block_until_ready(out_sca)
    out_vec = jax.block_until_ready(out_vec)

    ref_sca, ref_vec = ref_forward(params, edge_attr, pos_compose, idx_i, idx_j,
                                   tri_edge_index, tri_edge_feat, num_heads)

    np.testing.assert_allclose(np.asarray(out_sca), np.asarray(ref_sca),
                               rtol=2e-2, atol=2e-2)
    np.testing.assert_allclose(np.asarray(out_vec), np.asarray(ref_vec),
                               rtol=2e-2, atol=2e-2)
    print("KERNEL_OK")
</pallas_src>

<mosaic_0001>
module attributes {stable_mosaic.version = 11 : i64} {
  func.func @_qkv_kernel(%arg0: i32, %arg1: memref<16x40xf32, #tpu.memory_space<vmem>>, %arg2: memref<24x24xf32, #tpu.memory_space<vmem>>, %arg3: memref<24x24xf32, #tpu.memory_space<vmem>>, %arg4: memref<8x8xf32, #tpu.memory_space<vmem>>, %arg5: memref<16x8xf32, #tpu.memory_space<vmem>>, %arg6: memref<8x8xf32, #tpu.memory_space<vmem>>, %arg7: memref<1x8xf32, #tpu.memory_space<vmem>>, %arg8: memref<24x24xf32, #tpu.memory_space<vmem>>, %arg9: memref<24x24xf32, #tpu.memory_space<vmem>>, %arg10: memref<8x8xf32, #tpu.memory_space<vmem>>, %arg11: memref<16x8xf32, #tpu.memory_space<vmem>>, %arg12: memref<8x8xf32, #tpu.memory_space<vmem>>, %arg13: memref<1x8xf32, #tpu.memory_space<vmem>>, %arg14: memref<24x24xf32, #tpu.memory_space<vmem>>, %arg15: memref<24x24xf32, #tpu.memory_space<vmem>>, %arg16: memref<8x16xf32, #tpu.memory_space<vmem>>, %arg17: memref<16x16xf32, #tpu.memory_space<vmem>>, %arg18: memref<16x8xf32, #tpu.memory_space<vmem>>, %arg19: memref<1x8xf32, #tpu.memory_space<vmem>>, %arg20: memref<16x64xbf16, #tpu.memory_space<vmem>>, %arg21: memref<16x40xbf16, #tpu.memory_space<vmem>>) attributes {dimension_semantics = [#tpu.dimension_semantics<parallel>], iteration_bounds = array<i64: 2>, scalar_prefetch = 0 : i64, scratch_operands = 0 : i64, tpu.core_type = #tpu.core_type<tc>, window_params = [{transform_indices = @transform_0, window_bounds = array<i64: 16, 40>}, {pipeline_mode = #tpu.pipeline_mode<synchronous>, transform_indices = @transform_1, window_bounds = array<i64: 24, 24>}, {pipeline_mode = #tpu.pipeline_mode<synchronous>, transform_indices = @transform_2, window_bounds = array<i64: 24, 24>}, {pipeline_mode = #tpu.pipeline_mode<synchronous>, transform_indices = @transform_3, window_bounds = array<i64: 8, 8>}, {pipeline_mode = #tpu.pipeline_mode<synchronous>, transform_indices = @transform_4, window_bounds = array<i64: 16, 8>}, {pipeline_mode = #tpu.pipeline_mode<synchronous>, transform_indices = @transform_5, window_bounds = array<i64: 8, 8>}, {pipeline_mode = #tpu.pipeline_mode<synchronous>, transform_indices = @transform_6, window_bounds = array<i64: 1, 8>}, {pipeline_mode = #tpu.pipeline_mode<synchronous>, transform_indices = @transform_7, window_bounds = array<i64: 24, 24>}, {pipeline_mode = #tpu.pipeline_mode<synchronous>, transform_indices = @transform_8, window_bounds = array<i64: 24, 24>}, {pipeline_mode = #tpu.pipeline_mode<synchronous>, transform_indices = @transform_9, window_bounds = array<i64: 8, 8>}, {pipeline_mode = #tpu.pipeline_mode<synchronous>, transform_indices = @transform_10, window_bounds = array<i64: 16, 8>}, {pipeline_mode = #tpu.pipeline_mode<synchronous>, transform_indices = @transform_11, window_bounds = array<i64: 8, 8>}, {pipeline_mode = #tpu.pipeline_mode<synchronous>, transform_indices = @transform_12, window_bounds = array<i64: 1, 8>}, {pipeline_mode = #tpu.pipeline_mode<synchronous>, transform_indices = @transform_13, window_bounds = array<i64: 24, 24>}, {pipeline_mode = #tpu.pipeline_mode<synchronous>, transform_indices = @transform_14, window_bounds = array<i64: 24, 24>}, {pipeline_mode = #tpu.pipeline_mode<synchronous>, transform_indices = @transform_15, window_bounds = array<i64: 8, 16>}, {pipeline_mode = #tpu.pipeline_mode<synchronous>, transform_indices = @transform_16, window_bounds = array<i64: 16, 16>}, {pipeline_mode = #tpu.pipeline_mode<synchronous>, transform_indices = @transform_17, window_bounds = array<i64: 16, 8>}, {pipeline_mode = #tpu.pipeline_mode<synchronous>, transform_indices = @transform_18, window_bounds = array<i64: 1, 8>}, {transform_indices = @transform_19, window_bounds = array<i64: 16, 64>}, {transform_indices = @transform_20, window_bounds = array<i64: 16, 40>}]} {
    %c0 = arith.constant 0 : index
    %c0_0 = arith.constant 0 : index
    %0 = vector.load %arg1[%c0, %c0_0] : memref<16x40xf32, #tpu.memory_space<vmem>>, vector<16x40xf32>
    %1 = vector.extract_strided_slice %0 {offsets = [0, 0], sizes = [16, 16], strides = [1, 1]} : vector<16x40xf32> to vector<16x16xf32>
    %2 = vector.extract_strided_slice %0 {offsets = [0, 16], sizes = [16, 24], strides = [1, 1]} : vector<16x40xf32> to vector<16x24xf32>
    %c0_1 = arith.constant 0 : index
    %c0_2 = arith.constant 0 : index
    %3 = vector.load %arg2[%c0_1, %c0_2] : memref<24x24xf32, #tpu.memory_space<vmem>>, vector<24x24xf32>
    %c0_3 = arith.constant 0 : index
    %c0_4 = arith.constant 0 : index
    %4 = vector.load %arg3[%c0_3, %c0_4] : memref<24x24xf32, #tpu.memory_space<vmem>>, vector<24x24xf32>
    %c0_5 = arith.constant 0 : index
    %c0_6 = arith.constant 0 : index
    %5 = vector.load %arg4[%c0_5, %c0_6] : memref<8x8xf32, #tpu.memory_space<vmem>>, vector<8x8xf32>
    %c0_7 = arith.constant 0 : index
    %c0_8 = arith.constant 0 : index
    %6 = vector.load %arg5[%c0_7, %c0_8] : memref<16x8xf32, #tpu.memory_space<vmem>>, vector<16x8xf32>
    %c0_9 = arith.constant 0 : index
    %c0_10 = arith.constant 0 : index
    %7 = vector.load %arg6[%c0_9, %c0_10] : memref<8x8xf32, #tpu.memory_space<vmem>>, vector<8x8xf32>
    %c0_11 = arith.constant 0 : index
    %c0_12 = arith.constant 0 : index
    %8 = vector.load %arg7[%c0_11, %c0_12] : memref<1x8xf32, #tpu.memory_space<vmem>>, vector<1x8xf32>
    %cst = arith.constant dense<0.000000e+00> : vector<16x24xf32>
    %9 = tpu.matmul %2, %3, %cst {dimension_numbers = #tpu.dot_dimension_numbers<[1], [0], [0], [1], [0, 0, 1, 1], [], []>} : vector<16x24xf32>, vector<24x24xf32>, vector<16x24xf32> -> vector<16x24xf32>
    %10 = vector.extract_strided_slice %9 {offsets = [0, 0], sizes = [16, 8], strides = [1, 1]} : vector<16x24xf32> to vector<16x8xf32>
    %11 = vector.extract_strided_slice %9 {offsets = [0, 8], sizes = [16, 8], strides = [1, 1]} : vector<16x24xf32> to vector<16x8xf32>
    %12 = vector.extract_strided_slice %9 {offsets = [0, 16], sizes = [16, 8], strides = [1, 1]} : vector<16x24xf32> to vector<16x8xf32>
    %13 = arith.mulf %10, %10 : vector<16x8xf32>
    %14 = arith.mulf %11, %11 : vector<16x8xf32>
    %15 = arith.addf %13, %14 : vector<16x8xf32>
    %16 = arith.mulf %12, %12 : vector<16x8xf32>
    %17 = arith.addf %15, %16 : vector<16x8xf32>
    %18 = math.sqrt %17 : vector<16x8xf32>
    %cst_13 = arith.constant dense<0.000000e+00> : vector<16x8xf32>
    %19 = tpu.matmul %18, %5, %cst_13 {dimension_numbers = #tpu.dot_dimension_numbers<[1], [0], [0], [1], [0, 0, 1, 1], [], []>} : vector<16x8xf32>, vector<8x8xf32>, vector<16x8xf32> -> vector<16x8xf32>
    %cst_14 = arith.constant dense<0.000000e+00> : vector<16x8xf32>
    %20 = tpu.matmul %1, %6, %cst_14 {dimension_numbers = #tpu.dot_dimension_numbers<[1], [0], [0], [1], [0, 0, 1, 1], [], []>} : vector<16x16xf32>, vector<16x8xf32>, vector<16x8xf32> -> vector<16x8xf32>
    %21 = arith.addf %19, %20 : vector<16x8xf32>
    %cst_15 = arith.constant dense<0.000000e+00> : vector<16x8xf32>
    %22 = tpu.matmul %21, %7, %cst_15 {dimension_numbers = #tpu.dot_dimension_numbers<[1], [0], [0], [1], [0, 0, 1, 1], [], []>} : vector<16x8xf32>, vector<8x8xf32>, vector<16x8xf32> -> vector<16x8xf32>
    %23 = vector.broadcast %8 : vector<1x8xf32> to vector<16x8xf32>
    %24 = arith.addf %22, %23 : vector<16x8xf32>
    %25 = arith.negf %24 : vector<16x8xf32>
    %26 = math.exp %25 : vector<16x8xf32>
    %cst_16 = arith.constant 1.000000e+00 : f32
    %27 = vector.broadcast %cst_16 : f32 to vector<16x8xf32>
    %28 = arith.addf %27, %26 : vector<16x8xf32>
    %29 = arith.divf %27, %28 : vector<16x8xf32>
    %cst_17 = arith.constant dense<0.000000e+00> : vector<16x24xf32>
    %30 = tpu.matmul %9, %4, %cst_17 {dimension_numbers = #tpu.dot_dimension_numbers<[1], [0], [0], [1], [0, 0, 1, 1], [], []>} : vector<16x24xf32>, vector<24x24xf32>, vector<16x24xf32> -> vector<16x24xf32>
    %31 = tpu.concatenate %29, %29, %29 in 1 : vector<16x8xf32>, vector<16x8xf32>, vector<16x8xf32> -> vector<16x24xf32>
    %32 = arith.mulf %31, %30 : vector<16x24xf32>
    %c0_18 = arith.constant 0 : index
    %c0_19 = arith.constant 0 : index
    %33 = vector.load %arg8[%c0_18, %c0_19] : memref<24x24xf32, #tpu.memory_space<vmem>>, vector<24x24xf32>
    %c0_20 = arith.constant 0 : index
    %c0_21 = arith.constant 0 : index
    %34 = vector.load %arg9[%c0_20, %c0_21] : memref<24x24xf32, #tpu.memory_space<vmem>>, vector<24x24xf32>
    %c0_22 = arith.constant 0 : index
    %c0_23 = arith.constant 0 : index
    %35 = vector.load %arg10[%c0_22, %c0_23] : memref<8x8xf32, #tpu.memory_space<vmem>>, vector<8x8xf32>
    %c0_24 = arith.constant 0 : index
    %c0_25 = arith.constant 0 : index
    %36 = vector.load %arg11[%c0_24, %c0_25] : memref<16x8xf32, #tpu.memory_space<vmem>>, vector<16x8xf32>
    %c0_26 = arith.constant 0 : index
    %c0_27 = arith.constant 0 : index
    %37 = vector.load %arg12[%c0_26, %c0_27] : memref<8x8xf32, #tpu.memory_space<vmem>>, vector<8x8xf32>
    %c0_28 = arith.constant 0 : index
    %c0_29 = arith.constant 0 : index
    %38 = vector.load %arg13[%c0_28, %c0_29] : memref<1x8xf32, #tpu.memory_space<vmem>>, vector<1x8xf32>
    %cst_30 = arith.constant dense<0.000000e+00> : vector<16x24xf32>
    %39 = tpu.matmul %2, %33, %cst_30 {dimension_numbers = #tpu.dot_dimension_numbers<[1], [0], [0], [1], [0, 0, 1, 1], [], []>} : vector<16x24xf32>, vector<24x24xf32>, vector<16x24xf32> -> vector<16x24xf32>
    %40 = vector.extract_strided_slice %39 {offsets = [0, 0], sizes = [16, 8], strides = [1, 1]} : vector<16x24xf32> to vector<16x8xf32>
    %41 = vector.extract_strided_slice %39 {offsets = [0, 8], sizes = [16, 8], strides = [1, 1]} : vector<16x24xf32> to vector<16x8xf32>
    %42 = vector.extract_strided_slice %39 {offsets = [0, 16], sizes = [16, 8], strides = [1, 1]} : vector<16x24xf32> to vector<16x8xf32>
    %43 = arith.mulf %40, %40 : vector<16x8xf32>
    %44 = arith.mulf %41, %41 : vector<16x8xf32>
    %45 = arith.addf %43, %44 : vector<16x8xf32>
    %46 = arith.mulf %42, %42 : vector<16x8xf32>
    %47 = arith.addf %45, %46 : vector<16x8xf32>
    %48 = math.sqrt %47 : vector<16x8xf32>
    %cst_31 = arith.constant dense<0.000000e+00> : vector<16x8xf32>
    %49 = tpu.matmul %48, %35, %cst_31 {dimension_numbers = #tpu.dot_dimension_numbers<[1], [0], [0], [1], [0, 0, 1, 1], [], []>} : vector<16x8xf32>, vector<8x8xf32>, vector<16x8xf32> -> vector<16x8xf32>
    %cst_32 = arith.constant dense<0.000000e+00> : vector<16x8xf32>
    %50 = tpu.matmul %1, %36, %cst_32 {dimension_numbers = #tpu.dot_dimension_numbers<[1], [0], [0], [1], [0, 0, 1, 1], [], []>} : vector<16x16xf32>, vector<16x8xf32>, vector<16x8xf32> -> vector<16x8xf32>
    %51 = arith.addf %49, %50 : vector<16x8xf32>
    %cst_33 = arith.constant dense<0.000000e+00> : vector<16x8xf32>
    %52 = tpu.matmul %51, %37, %cst_33 {dimension_numbers = #tpu.dot_dimension_numbers<[1], [0], [0], [1], [0, 0, 1, 1], [], []>} : vector<16x8xf32>, vector<8x8xf32>, vector<16x8xf32> -> vector<16x8xf32>
    %53 = vector.broadcast %38 : vector<1x8xf32> to vector<16x8xf32>
    %54 = arith.addf %52, %53 : vector<16x8xf32>
    %55 = arith.negf %54 : vector<16x8xf32>
    %56 = math.exp %55 : vector<16x8xf32>
    %cst_34 = arith.constant 1.000000e+00 : f32
    %57 = vector.broadcast %cst_34 : f32 to vector<16x8xf32>
    %58 = arith.addf %57, %56 : vector<16x8xf32>
    %59 = arith.divf %57, %58 : vector<16x8xf32>
    %cst_35 = arith.constant dense<0.000000e+00> : vector<16x24xf32>
    %60 = tpu.matmul %39, %34, %cst_35 {dimension_numbers = #tpu.dot_dimension_numbers<[1], [0], [0], [1], [0, 0, 1, 1], [], []>} : vector<16x24xf32>, vector<24x24xf32>, vector<16x24xf32> -> vector<16x24xf32>
    %61 = tpu.concatenate %59, %59, %59 in 1 : vector<16x8xf32>, vector<16x8xf32>, vector<16x8xf32> -> vector<16x24xf32>
    %62 = arith.mulf %61, %60 : vector<16x24xf32>
    %c0_36 = arith.constant 0 : index
    %c0_37 = arith.constant 0 : index
    %63 = vector.load %arg14[%c0_36, %c0_37] : memref<24x24xf32, #tpu.memory_space<vmem>>, vector<24x24xf32>
    %c0_38 = arith.constant 0 : index
    %c0_39 = arith.constant 0 : index
    %64 = vector.load %arg15[%c0_38, %c0_39] : memref<24x24xf32, #tpu.memory_space<vmem>>, vector<24x24xf32>
    %c0_40 = arith.constant 0 : index
    %c0_41 = arith.constant 0 : index
    %65 = vector.load %arg16[%c0_40, %c0_41] : memref<8x16xf32, #tpu.memory_space<vmem>>, vector<8x16xf32>
    %c0_42 = arith.constant 0 : index
    %c0_43 = arith.constant 0 : index
    %66 = vector.load %arg17[%c0_42, %c0_43] : memref<16x16xf32, #tpu.memory_space<vmem>>, vector<16x16xf32>
    %c0_44 = arith.constant 0 : index
    %c0_45 = arith.constant 0 : index
    %67 = vector.load %arg18[%c0_44, %c0_45] : memref<16x8xf32, #tpu.memory_space<vmem>>, vector<16x8xf32>
    %c0_46 = arith.constant 0 : index
    %c0_47 = arith.constant 0 : index
    %68 = vector.load %arg19[%c0_46, %c0_47] : memref<1x8xf32, #tpu.memory_space<vmem>>, vector<1x8xf32>
    %cst_48 = arith.constant dense<0.000000e+00> : vector<16x24xf32>
    %69 = tpu.matmul %2, %63, %cst_48 {dimension_numbers = #tpu.dot_dimension_numbers<[1], [0], [0], [1], [0, 0, 1, 1], [], []>} : vector<16x24xf32>, vector<24x24xf32>, vector<16x24xf32> -> vector<16x24xf32>
    %70 = vector.extract_strided_slice %69 {offsets = [0, 0], sizes = [16, 8], strides = [1, 1]} : vector<16x24xf32> to vector<16x8xf32>
    %71 = vector.extract_strided_slice %69 {offsets = [0, 8], sizes = [16, 8], strides = [1, 1]} : vector<16x24xf32> to vector<16x8xf32>
    %72 = vector.extract_strided_slice %69 {offsets = [0, 16], sizes = [16, 8], strides = [1, 1]} : vector<16x24xf32> to vector<16x8xf32>
    %73 = arith.mulf %70, %70 : vector<16x8xf32>
    %74 = arith.mulf %71, %71 : vector<16x8xf32>
    %75 = arith.addf %73, %74 : vector<16x8xf32>
    %76 = arith.mulf %72, %72 : vector<16x8xf32>
    %77 = arith.addf %75, %76 : vector<16x8xf32>
    %78 = math.sqrt %77 : vector<16x8xf32>
    %cst_49 = arith.constant dense<0.000000e+00> : vector<16x16xf32>
    %79 = tpu.matmul %78, %65, %cst_49 {dimension_numbers = #tpu.dot_dimension_numbers<[1], [0], [0], [1], [0, 0, 1, 1], [], []>} : vector<16x8xf32>, vector<8x16xf32>, vector<16x16xf32> -> vector<16x16xf32>
    %cst_50 = arith.constant dense<0.000000e+00> : vector<16x16xf32>
    %80 = tpu.matmul %1, %66, %cst_50 {dimension_numbers = #tpu.dot_dimension_numbers<[1], [0], [0], [1], [0, 0, 1, 1], [], []>} : vector<16x16xf32>, vector<16x16xf32>, vector<16x16xf32> -> vector<16x16xf32>
    %81 = arith.addf %79, %80 : vector<16x16xf32>
    %cst_51 = arith.constant dense<0.000000e+00> : vector<16x8xf32>
    %82 = tpu.matmul %81, %67, %cst_51 {dimension_numbers = #tpu.dot_dimension_numbers<[1], [0], [0], [1], [0, 0, 1, 1], [], []>} : vector<16x16xf32>, vector<16x8xf32>, vector<16x8xf32> -> vector<16x8xf32>
    %83 = vector.broadcast %68 : vector<1x8xf32> to vector<16x8xf32>
    %84 = arith.addf %82, %83 : vector<16x8xf32>
    %85 = arith.negf %84 : vector<16x8xf32>
    %86 = math.exp %85 : vector<16x8xf32>
    %cst_52 = arith.constant 1.000000e+00 : f32
    %87 = vector.broadcast %cst_52 : f32 to vector<16x8xf32>
    %88 = arith.addf %87, %86 : vector<16x8xf32>
    %89 = arith.divf %87, %88 : vector<16x8xf32>
    %cst_53 = arith.constant dense<0.000000e+00> : vector<16x24xf32>
    %90 = tpu.matmul %69, %64, %cst_53 {dimension_numbers = #tpu.dot_dimension_numbers<[1], [0], [0], [1], [0, 0, 1, 1], [], []>} : vector<16x24xf32>, vector<24x24xf32>, vector<16x24xf32> -> vector<16x24xf32>
    %91 = tpu.concatenate %89, %89, %89 in 1 : vector<16x8xf32>, vector<16x8xf32>, vector<16x8xf32> -> vector<16x24xf32>
    %92 = arith.mulf %91, %90 : vector<16x24xf32>
    %93 = tpu.concatenate %21, %32, %51, %62 in 1 : vector<16x8xf32>, vector<16x24xf32>, vector<16x8xf32>, vector<16x24xf32> -> vector<16x64xf32>
    %94 = arith.truncf %93 : vector<16x64xf32> to vector<16x64xbf16>
    %c0_54 = arith.constant 0 : index
    %c0_55 = arith.constant 0 : index
    %95 = vector.load %arg20[%c0_54, %c0_55] : memref<16x64xbf16, #tpu.memory_space<vmem>>, vector<16x64xbf16>
    tpu.vector_store %arg20[%c0_54, %c0_55], %94 {strides = array<i32>} : memref<16x64xbf16, #tpu.memory_space<vmem>>, vector<16x64xbf16>,
    %96 = tpu.concatenate %81, %92 in 1 : vector<16x16xf32>, vector<16x24xf32> -> vector<16x40xf32>
    %97 = arith.truncf %96 : vector<16x40xf32> to vector<16x40xbf16>
    %c0_56 = arith.constant 0 : index
    %c0_57 = arith.constant 0 : index
    %98 = vector.load %arg21[%c0_56, %c0_57] : memref<16x40xbf16, #tpu.memory_space<vmem>>, vector<16x40xbf16>
    tpu.vector_store %arg21[%c0_56, %c0_57], %97 {strides = array<i32>} : memref<16x40xbf16, #tpu.memory_space<vmem>>, vector<16x40xbf16>,
    return
  }
  func.func @transform_0(%arg0: i32) -> (i32, i32) {
    %c0_i32 = arith.constant 0 : i32
    %c0_i32_0 = arith.constant 0 : i32
    return %arg0, %c0_i32 : i32, i32
  }
  func.func @transform_1(%arg0: i32) -> (i32, i32) {
    %c0_i32 = arith.constant 0 : i32
    %c0_i32_0 = arith.constant 0 : i32
    %c0_i32_1 = arith.constant 0 : i32
    return %c0_i32, %c0_i32_0 : i32, i32
  }
  func.func @transform_2(%arg0: i32) -> (i32, i32) {
    %c0_i32 = arith.constant 0 : i32
    %c0_i32_0 = arith.constant 0 : i32
    %c0_i32_1 = arith.constant 0 : i32
    return %c0_i32, %c0_i32_0 : i32, i32
  }
  func.func @transform_3(%arg0: i32) -> (i32, i32) {
    %c0_i32 = arith.constant 0 : i32
    %c0_i32_0 = arith.constant 0 : i32
    %c0_i32_1 = arith.constant 0 : i32
    return %c0_i32, %c0_i32_0 : i32, i32
  }
  func.func @transform_4(%arg0: i32) -> (i32, i32) {
    %c0_i32 = arith.constant 0 : i32
    %c0_i32_0 = arith.constant 0 : i32
    %c0_i32_1 = arith.constant 0 : i32
    return %c0_i32, %c0_i32_0 : i32, i32
  }
  func.func @transform_5(%arg0: i32) -> (i32, i32) {
    %c0_i32 = arith.constant 0 : i32
    %c0_i32_0 = arith.constant 0 : i32
    %c0_i32_1 = arith.constant 0 : i32
    return %c0_i32, %c0_i32_0 : i32, i32
  }
  func.func @transform_6(%arg0: i32) -> (i32, i32) {
    %c0_i32 = arith.constant 0 : i32
    %c0_i32_0 = arith.constant 0 : i32
    %c0_i32_1 = arith.constant 0 : i32
    return %c0_i32, %c0_i32_0 : i32, i32
  }
  func.func @transform_7(%arg0: i32) -> (i32, i32) {
    %c0_i32 = arith.constant 0 : i32
    %c0_i32_0 = arith.constant 0 : i32
    %c0_i32_1 = arith.constant 0 : i32
    return %c0_i32, %c0_i32_0 : i32, i32
  }
  func.func @transform_8(%arg0: i32) -> (i32, i32) {
    %c0_i32 = arith.constant 0 : i32
    %c0_i32_0 = arith.constant 0 : i32
    %c0_i32_1 = arith.constant 0 : i32
    return %c0_i32, %c0_i32_0 : i32, i32
  }
  func.func @transform_9(%arg0: i32) -> (i32, i32) {
    %c0_i32 = arith.constant 0 : i32
    %c0_i32_0 = arith.constant 0 : i32
    %c0_i32_1 = arith.constant 0 : i32
    return %c0_i32, %c0_i32_0 : i32, i32
  }
  func.func @transform_10(%arg0: i32) -> (i32, i32) {
    %c0_i32 = arith.constant 0 : i32
    %c0_i32_0 = arith.constant 0 : i32
    %c0_i32_1 = arith.constant 0 : i32
    return %c0_i32, %c0_i32_0 : i32, i32
  }
  func.func @transform_11(%arg0: i32) -> (i32, i32) {
    %c0_i32 = arith.constant 0 : i32
    %c0_i32_0 = arith.constant 0 : i32
    %c0_i32_1 = arith.constant 0 : i32
    return %c0_i32, %c0_i32_0 : i32, i32
  }
  func.func @transform_12(%arg0: i32) -> (i32, i32) {
    %c0_i32 = arith.constant 0 : i32
    %c0_i32_0 = arith.constant 0 : i32
    %c0_i32_1 = arith.constant 0 : i32
    return %c0_i32, %c0_i32_0 : i32, i32
  }
  func.func @transform_13(%arg0: i32) -> (i32, i32) {
    %c0_i32 = arith.constant 0 : i32
    %c0_i32_0 = arith.constant 0 : i32
    %c0_i32_1 = arith.constant 0 : i32
    return %c0_i32, %c0_i32_0 : i32, i32
  }
  func.func @transform_14(%arg0: i32) -> (i32, i32) {
    %c0_i32 = arith.constant 0 : i32
    %c0_i32_0 = arith.constant 0 : i32
    %c0_i32_1 = arith.constant 0 : i32
    return %c0_i32, %c0_i32_0 : i32, i32
  }
  func.func @transform_15(%arg0: i32) -> (i32, i32) {
    %c0_i32 = arith.constant 0 : i32
    %c0_i32_0 = arith.constant 0 : i32
    %c0_i32_1 = arith.constant 0 : i32
    return %c0_i32, %c0_i32_0 : i32, i32
  }
  func.func @transform_16(%arg0: i32) -> (i32, i32) {
    %c0_i32 = arith.constant 0 : i32
    %c0_i32_0 = arith.constant 0 : i32
    %c0_i32_1 = arith.constant 0 : i32
    return %c0_i32, %c0_i32_0 : i32, i32
  }
  func.func @transform_17(%arg0: i32) -> (i32, i32) {
    %c0_i32 = arith.constant 0 : i32
    %c0_i32_0 = arith.constant 0 : i32
    %c0_i32_1 = arith.constant 0 : i32
    return %c0_i32, %c0_i32_0 : i32, i32
  }
  func.func @transform_18(%arg0: i32) -> (i32, i32) {
    %c0_i32 = arith.constant 0 : i32
    %c0_i32_0 = arith.constant 0 : i32
    %c0_i32_1 = arith.constant 0 : i32
    return %c0_i32, %c0_i32_0 : i32, i32
  }
  func.func @transform_19(%arg0: i32) -> (i32, i32) {
    %c0_i32 = arith.constant 0 : i32
    %c0_i32_0 = arith.constant 0 : i32
    return %arg0, %c0_i32 : i32, i32
  }
  func.func @transform_20(%arg0: i32) -> (i32, i32) {
    %c0_i32 = arith.constant 0 : i32
    %c0_i32_0 = arith.constant 0 : i32
    return %arg0, %c0_i32 : i32, i32
  }
}

</mosaic_0001>

<llo_original>
// kernel: tpu_custom_call.1
$region0: #{tpu_custom_call.1}
  #allocation0 [shape = 'u32[]', space=smem, size = 0x4, offset = 0x4, fixed_abs, tag = 'smem constant byte address 0x4 - core index']
  #allocation1 [shape = 'u32[72,128]{1,0:T(1,128)}', space=vmem, size = 0x9000, scoped, tag = 'internal scratch']
  %s0 = inlined_call_operand.vmem [shape: f32[32,40], index: 0, kind: input, shape index: {}]
  %s1 = inlined_call_operand.vmem [shape: f32[24,24], index: 1, kind: input, shape index: {}]
  %s2 = inlined_call_operand.hbm [shape: f32[24,24], index: 2, kind: input, shape index: {}]
  %s3 = inlined_call_operand.hbm [shape: f32[8,8], index: 3, kind: input, shape index: {}]
  %s4 = inlined_call_operand.vmem [shape: f32[16,8], index: 4, kind: input, shape index: {}]
  %s5 = inlined_call_operand.hbm [shape: f32[8,8], index: 5, kind: input, shape index: {}]
  %s6 = inlined_call_operand.hbm [shape: f32[1,8], index: 6, kind: input, shape index: {}]
  %s7 = inlined_call_operand.hbm [shape: f32[24,24], index: 7, kind: input, shape index: {}]
  %s8 = inlined_call_operand.hbm [shape: f32[24,24], index: 8, kind: input, shape index: {}]
  %s9 = inlined_call_operand.vmem [shape: f32[8,8], index: 9, kind: input, shape index: {}]
  %s10 = inlined_call_operand.vmem [shape: f32[16,8], index: 10, kind: input, shape index: {}]
  %s11 = inlined_call_operand.hbm [shape: f32[8,8], index: 11, kind: input, shape index: {}]
  %s12 = inlined_call_operand.vmem [shape: f32[1,8], index: 12, kind: input, shape index: {}]
  %s13 = inlined_call_operand.hbm [shape: f32[24,24], index: 13, kind: input, shape index: {}]
  %s14 = inlined_call_operand.hbm [shape: f32[24,24], index: 14, kind: input, shape index: {}]
  %s15 = inlined_call_operand.hbm [shape: f32[8,16], index: 15, kind: input, shape index: {}]
  %s16 = inlined_call_operand.hbm [shape: f32[16,16], index: 16, kind: input, shape index: {}]
  %s17 = inlined_call_operand.vmem [shape: f32[16,8], index: 17, kind: input, shape index: {}]
  %s18 = inlined_call_operand.vmem [shape: f32[1,8], index: 18, kind: input, shape index: {}]
  %s19 = inlined_call_operand.hbm [shape: bf16[32,64], index: 19, kind: output, shape index: {0}]
  %s20 = inlined_call_operand.hbm [shape: bf16[32,40], index: 20, kind: output, shape index: {1}]
  %21 = xla_tuple %s19, %s20
  %s22 = sld [smem:[#allocation0]]
  $region161: #{tpu_custom_call.1} parent=0
    _
  %s24 = ssub.s32 1, %s22
  %s25 = scalar_select 0, %s24, %s22
  $region1: #{tpu_custom_call.1} parent=0
    #allocation2 [shape = 'u8[12288]{0}', space=vmem, size = 0x3000, scoped, tag = 'input window, operand 2, single buffered']
    #allocation3 [shape = 's32[2]{0}', space=sflag, size = 0x8, scoped, tag = 'scoped memory for tpu_custom_call.1']
    #allocation4 [shape = 's32[2]{0}', space=sflag, size = 0x8, scoped, tag = 'scoped memory for tpu_custom_call.1']
    #allocation5 [shape = 'u8[4096]{0}', space=vmem, size = 0x1000, scoped, tag = 'input window, operand 3, single buffered']
    #allocation6 [shape = 's32[1]{0}', space=sflag, size = 0x4, scoped, tag = 'scoped memory for tpu_custom_call.1']
    #allocation7 [shape = 'u8[4096]{0}', space=vmem, size = 0x1000, scoped, tag = 'input window, operand 5, single buffered']
    #allocation8 [shape = 'u8[512]{0}', space=vmem, size = 0x400, scoped, tag = 'input window, operand 6, single buffered']
    #allocation9 [shape = 's32[1]{0}', space=sflag, size = 0x4, scoped, tag = 'scoped memory for tpu_custom_call.1']
    #allocation10 [shape = 'u8[12288]{0}', space=vmem, size = 0x3000, scoped, tag = 'input window, operand 7, single buffered']
    #allocation11 [shape = 'u8[12288]{0}', space=vmem, size = 0x3000, scoped, tag = 'input window, operand 8, single buffered']
    #allocation12 [shape = 's32[1]{0}', space=sflag, size = 0x4, scoped, tag = 'scoped memory for tpu_custom_call.1']
    #allocation13 [shape = 'u8[4096]{0}', space=vmem, size = 0x1000, scoped, tag = 'input window, operand 11, single buffered']
    #allocation14 [shape = 'u8[12288]{0}', space=vmem, size = 0x3000, scoped, tag = 'input window, operand 13, single buffered']
    #allocation15 [shape = 's32[1]{0}', space=sflag, size = 0x4, scoped, tag = 'scoped memory for tpu_custom_call.1']
    #allocation16 [shape = 'u8[12288]{0}', space=vmem, size = 0x3000, scoped, tag = 'input window, operand 14, single buffered']
    #allocation17 [shape = 'u8[4096]{0}', space=vmem, size = 0x1000, scoped, tag = 'input window, operand 15, single buffered']
    #allocation18 [shape = 's32[1]{0}', space=sflag, size = 0x4, scoped, tag = 'scoped memory for tpu_custom_call.1']
    #allocation19 [shape = 'u8[8192]{0}', space=vmem, size = 0x2000, scoped, tag = 'input window, operand 16, single buffered']
    #allocation20 [shape = 'u8[8192]{0}', space=vmem, size = 0x2000, scoped, tag = 'output window, operand 0']
    #allocation21 [shape = 'u8[8192]{0}', space=vmem, size = 0x2000, scoped, tag = 'output window, operand 1']
    #allocation22 [shape = 's32[2]{0}', space=sflag, size = 0x8, scoped, tag = 'scoped memory for tpu_custom_call.1']
    %26 = vsyncpa [#allocation3], 0
    %27 = vsyncpa [#allocation6], 0
    %28 = vsyncpa [#allocation9], 0
    %29 = vsyncpa [#allocation12], 0
    %30 = vsyncpa [#allocation15], 0
    %31 = vsyncpa [#allocation18], 0
    %32 = vsyncpa [#allocation4], 0
    %s33 = scalar_lea.sflag [#allocation4], 1
    %34 = vsyncpa %s33, 0
    %35 = vsyncpa [#allocation22], 0
    %s36 = scalar_lea.sflag [#allocation22], 1
    %37 = vsyncpa %s36, 0
    loop: start=0, step=1, limit=4
    $region2: #{tpu_custom_call.1} parent=1 // loop_pre_header
      _
    $region3: #{tpu_custom_call.1} parent=1 // loop_header
      %s39 = sphi 0, %s43
      %p40 = scmp.ge.s32.totalorder %s39, 4
      %s49 = sphi 0, %s51
      %s52 = sphi 0, %s49
      %s53 = sphi 0, %s52
      %s69 = sphi 0, %s53
      %s73 = sphi 0, %s73
      %s75 = sphi 0, %s73
      %s76 = sphi 0, %s75
      %s90 = sphi 0, %s76
      %s94 = sphi 0, %s94
      %s96 = sphi 0, %s94
      %s97 = sphi 0, %s96
      %s111 = sphi 0, %s97
      %s115 = sphi 0, %s115
      %s117 = sphi 0, %s115
      %s118 = sphi 0, %s117
      %s132 = sphi 0, %s118
      %s136 = sphi 0, %s136
      %s138 = sphi 0, %s136
      %s139 = sphi 0, %s138
      %s153 = sphi 0, %s139
      %s157 = sphi 0, %s157
      %s159 = sphi 0, %s157
      %s160 = sphi 0, %s159
      %s174 = sphi 0, %s160
      %s178 = sphi 0, %s178
      %s180 = sphi 0, %s178
      %s181 = sphi 0, %s180
      %s195 = sphi 0, %s181
      %s199 = sphi 0, %s199
      %s201 = sphi 0, %s199
      %s202 = sphi 0, %s201
      %s216 = sphi 0, %s202
      %s220 = sphi 0, %s220
      %s222 = sphi 0, %s220
      %s223 = sphi 0, %s222
      %s237 = sphi 0, %s223
      %s241 = sphi 0, %s241
      %s243 = sphi 0, %s241
      %s244 = sphi 0, %s243
      %s258 = sphi 0, %s244
      %s262 = sphi 0, %s262
      %s264 = sphi 0, %s262
      %s265 = sphi 0, %s264
      %s279 = sphi 0, %s265
      %s283 = sphi 0, %s283
      %s285 = sphi 0, %s283
      %s286 = sphi 0, %s285
      %s300 = sphi 0, %s286
      %s304 = sphi 0, %s304
      %s306 = sphi 0, %s304
      %s307 = sphi 0, %s306
      %s321 = sphi 0, %s307
      %s325 = sphi 0, %s325
      %s327 = sphi 0, %s325
      %s328 = sphi 0, %s327
      %s342 = sphi 0, %s328
      %s346 = sphi 0, %s346
      %s348 = sphi 0, %s346
      %s349 = sphi 0, %s348
      %s363 = sphi 0, %s349
      %s367 = sphi 0, %s367
      %s369 = sphi 0, %s367
      %s370 = sphi 0, %s369
      %s384 = sphi 0, %s370
      %s388 = sphi 0, %s388
      %s390 = sphi 0, %s388
      %s391 = sphi 0, %s390
      %s405 = sphi 0, %s391
      %s409 = sphi 0, %s409
      %s411 = sphi 0, %s409
      %s412 = sphi 0, %s411
      %s426 = sphi 0, %s412
      %s430 = sphi 0, %s430
      %s432 = sphi 0, %s430
      %s433 = sphi 0, %s432
      %s447 = sphi 0, %s433
      %s453 = sphi 0, %s455
      %s456 = sphi 0, %s453
      %s457 = sphi 0, %s456
      %s473 = sphi 0, %s457
      %s479 = sphi 0, %s481
      %s482 = sphi 0, %s479
      %s483 = sphi 0, %s482
      %s499 = sphi 0, %s483
    $region4: #{tpu_custom_call.1} parent=1 // loop_header_branch
      %42 = sbr.rel (%p40) target = $region8
    $region5: #{tpu_custom_call.1} parent=1 // loop_body
      %s44 = ssub.s32 %s39, 1
      %s45 = ssub.s32 %s39, 2
      %s46 = sadd.s32 %s39, 1
      %s47 = ssub.s32 %s39, %s46
      %p48 = scmp.eq.s32.totalorder %s47, 0
      %s50 = sadd.s32 %s49, 1
      %s51 = scalar_select %p48, %s49, %s50
      %p54 = pneg %p48
      %p55 = scmp.eq.s32.totalorder %s39, 1
      %p56 = por %p54, %p55
      %p57 = scmp.ne.s32.totalorder %s49, %s52
      %p58 = scmp.eq.s32.totalorder %s39, 0
      %p59 = por %p57, %p58
      %p60 = scmp.ne.s32.totalorder %s49, %s52
      %p61 = scmp.eq.s32.totalorder %s44, 1
      %p62 = por %p60, %p61
      %p63 = scmp.ne.s32.totalorder %s52, %s53
      %p64 = scmp.eq.s32.totalorder %s44, 0
      %p65 = por %p63, %p64
      %p66 = scmp.ne.s32.totalorder %s52, %s53
      %p67 = scmp.eq.s32.totalorder %s45, 1
      %p68 = por %p66, %p67
      %p70 = scmp.ne.s32.totalorder %s53, %s69
      %p71 = scmp.eq.s32.totalorder %s45, 0
      %p72 = por %p70, %p71
      %s74 = sadd.s32 %s73, 1
      %p77 = scmp.eq.s32.totalorder %s39, 1
      %p78 = scmp.ne.s32.totalorder %s73, %s75
      %p79 = scmp.eq.s32.totalorder %s39, 0
      %p80 = por %p78, %p79
      %p81 = scmp.ne.s32.totalorder %s73, %s75
      %p82 = scmp.eq.s32.totalorder %s44, 1
      %p83 = por %p81, %p82
      %p84 = scmp.ne.s32.totalorder %s75, %s76
      %p85 = scmp.eq.s32.totalorder %s44, 0
      %p86 = por %p84, %p85
      %p87 = scmp.ne.s32.totalorder %s75, %s76
      %p88 = scmp.eq.s32.totalorder %s45, 1
      %p89 = por %p87, %p88
      %p91 = scmp.ne.s32.totalorder %s76, %s90
      %p92 = scmp.eq.s32.totalorder %s45, 0
      %p93 = por %p91, %p92
      %s95 = sadd.s32 %s94, 1
      %p98 = scmp.eq.s32.totalorder %s39, 1
      %p99 = scmp.ne.s32.totalorder %s94, %s96
      %p100 = scmp.eq.s32.totalorder %s39, 0
      %p101 = por %p99, %p100
      %p102 = scmp.ne.s32.totalorder %s94, %s96
      %p103 = scmp.eq.s32.totalorder %s44, 1
      %p104 = por %p102, %p103
      %p105 = scmp.ne.s32.totalorder %s96, %s97
      %p106 = scmp.eq.s32.totalorder %s44, 0
      %p107 = por %p105, %p106
      %p108 = scmp.ne.s32.totalorder %s96, %s97
      %p109 = scmp.eq.s32.totalorder %s45, 1
      %p110 = por %p108, %p109
      %p112 = scmp.ne.s32.totalorder %s97, %s111
      %p113 = scmp.eq.s32.totalorder %s45, 0
      %p114 = por %p112, %p113
      %s116 = sadd.s32 %s115, 1
      %p119 = scmp.eq.s32.totalorder %s39, 1
      %p120 = scmp.ne.s32.totalorder %s115, %s117
      %p121 = scmp.eq.s32.totalorder %s39, 0
      %p122 = por %p120, %p121
      %p123 = scmp.ne.s32.totalorder %s115, %s117
      %p124 = scmp.eq.s32.totalorder %s44, 1
      %p125 = por %p123, %p124
      %p126 = scmp.ne.s32.totalorder %s117, %s118
      %p127 = scmp.eq.s32.totalorder %s44, 0
      %p128 = por %p126, %p127
      %p129 = scmp.ne.s32.totalorder %s117, %s118
      %p130 = scmp.eq.s32.totalorder %s45, 1
      %p131 = por %p129, %p130
      %p133 = scmp.ne.s32.totalorder %s118, %s132
      %p134 = scmp.eq.s32.totalorder %s45, 0
      %p135 = por %p133, %p134
      %s137 = sadd.s32 %s136, 1
      %p140 = scmp.eq.s32.totalorder %s39, 1
      %p141 = scmp.ne.s32.totalorder %s136, %s138
      %p142 = scmp.eq.s32.totalorder %s39, 0
      %p143 = por %p141, %p142
      %p144 = scmp.ne.s32.totalorder %s136, %s138
      %p145 = scmp.eq.s32.totalorder %s44, 1
      %p146 = por %p144, %p145
      %p147 = scmp.ne.s32.totalorder %s138, %s139
      %p148 = scmp.eq.s32.totalorder %s44, 0
      %p149 = por %p147, %p148
      %p150 = scmp.ne.s32.totalorder %s138, %s139
      %p151 = scmp.eq.s32.totalorder %s45, 1
      %p152 = por %p150, %p151
      %p154 = scmp.ne.s32.totalorder %s139, %s153
      %p155 = scmp.eq.s32.totalorder %s45, 0
      %p156 = por %p154, %p155
      %s158 = sadd.s32 %s157, 1
      %p161 = scmp.eq.s32.totalorder %s39, 1
      %p162 = scmp.ne.s32.totalorder %s157, %s159
      %p163 = scmp.eq.s32.totalorder %s39, 0
      %p164 = por %p162, %p163
      %p165 = scmp.ne.s32.totalorder %s157, %s159
      %p166 = scmp.eq.s32.totalorder %s44, 1
      %p167 = por %p165, %p166
      %p168 = scmp.ne.s32.totalorder %s159, %s160
      %p169 = scmp.eq.s32.totalorder %s44, 0
      %p170 = por %p168, %p169
      %p171 = scmp.ne.s32.totalorder %s159, %s160
      %p172 = scmp.eq.s32.totalorder %s45, 1
      %p173 = por %p171, %p172
      %p175 = scmp.ne.s32.totalorder %s160, %s174
      %p176 = scmp.eq.s32.totalorder %s45, 0
      %p177 = por %p175, %p176
      %s179 = sadd.s32 %s178, 1
      %p182 = scmp.eq.s32.totalorder %s39, 1
      %p183 = scmp.ne.s32.totalorder %s178, %s180
      %p184 = scmp.eq.s32.totalorder %s39, 0
      %p185 = por %p183, %p184
      %p186 = scmp.ne.s32.totalorder %s178, %s180
      %p187 = scmp.eq.s32.totalorder %s44, 1
      %p188 = por %p186, %p187
      %p189 = scmp.ne.s32.totalorder %s180, %s181
      %p190 = scmp.eq.s32.totalorder %s44, 0
      %p191 = por %p189, %p190
      %p192 = scmp.ne.s32.totalorder %s180, %s181
      %p193 = scmp.eq.s32.totalorder %s45, 1
      %p194 = por %p192, %p193
      %p196 = scmp.ne.s32.totalorder %s181, %s195
      %p197 = scmp.eq.s32.totalorder %s45, 0
      %p198 = por %p196, %p197
      %s200 = sadd.s32 %s199, 1
      %p203 = scmp.eq.s32.totalorder %s39, 1
      %p204 = scmp.ne.s32.totalorder %s199, %s201
      %p205 = scmp.eq.s32.totalorder %s39, 0
      %p206 = por %p204, %p205
      %p207 = scmp.ne.s32.totalorder %s199, %s201
      %p208 = scmp.eq.s32.totalorder %s44, 1
      %p209 = por %p207, %p208
      %p210 = scmp.ne.s32.totalorder %s201, %s202
      %p211 = scmp.eq.s32.totalorder %s44, 0
      %p212 = por %p210, %p211
      %p213 = scmp.ne.s32.totalorder %s201, %s202
      %p214 = scmp.eq.s32.totalorder %s45, 1
      %p215 = por %p213, %p214
      %p217 = scmp.ne.s32.totalorder %s202, %s216
      %p218 = scmp.eq.s32.totalorder %s45, 0
      %p219 = por %p217, %p218
      %s221 = sadd.s32 %s220, 1
      %p224 = scmp.eq.s32.totalorder %s39, 1
      %p225 = scmp.ne.s32.totalorder %s220, %s222
      %p226 = scmp.eq.s32.totalorder %s39, 0
      %p227 = por %p225, %p226
      %p228 = scmp.ne.s32.totalorder %s220, %s222
      %p229 = scmp.eq.s32.totalorder %s44, 1
      %p230 = por %p228, %p229
      %p231 = scmp.ne.s32.totalorder %s222, %s223
      %p232 = scmp.eq.s32.totalorder %s44, 0
      %p233 = por %p231, %p232
      %p234 = scmp.ne.s32.totalorder %s222, %s223
      %p235 = scmp.eq.s32.totalorder %s45, 1
      %p236 = por %p234, %p235
      %p238 = scmp.ne.s32.totalorder %s223, %s237
      %p239 = scmp.eq.s32.totalorder %s45, 0
      %p240 = por %p238, %p239
      %s242 = sadd.s32 %s241, 1
      %p245 = scmp.eq.s32.totalorder %s39, 1
      %p246 = scmp.ne.s32.totalorder %s241, %s243
      %p247 = scmp.eq.s32.totalorder %s39, 0
      %p248 = por %p246, %p247
      %p249 = scmp.ne.s32.totalorder %s241, %s243
      %p250 = scmp.eq.s32.totalorder %s44, 1
      %p251 = por %p249, %p250
      %p252 = scmp.ne.s32.totalorder %s243, %s244
      %p253 = scmp.eq.s32.totalorder %s44, 0
      %p254 = por %p252, %p253
      %p255 = scmp.ne.s32.totalorder %s243, %s244
      %p256 = scmp.eq.s32.totalorder %s45, 1
      %p257 = por %p255, %p256
      %p259 = scmp.ne.s32.totalorder %s244, %s258
      %p260 = scmp.eq.s32.totalorder %s45, 0
      %p261 = por %p259, %p260
      %s263 = sadd.s32 %s262, 1
      %p266 = scmp.eq.s32.totalorder %s39, 1
      %p267 = scmp.ne.s32.totalorder %s262, %s264
      %p268 = scmp.eq.s32.totalorder %s39, 0
      %p269 = por %p267, %p268
      %p270 = scmp.ne.s32.totalorder %s262, %s264
      %p271 = scmp.eq.s32.totalorder %s44, 1
      %p272 = por %p270, %p271
      %p273 = scmp.ne.s32.totalorder %s264, %s265
      %p274 = scmp.eq.s32.totalorder %s44, 0
      %p275 = por %p273, %p274
      %p276 = scmp.ne.s32.totalorder %s264, %s265
      %p277 = scmp.eq.s32.totalorder %s45, 1
      %p278 = por %p276, %p277
      %p280 = scmp.ne.s32.totalorder %s265, %s279
      %p281 = scmp.eq.s32.totalorder %s45, 0
      %p282 = por %p280, %p281
      %s284 = sadd.s32 %s283, 1
      %p287 = scmp.eq.s32.totalorder %s39, 1
      %p288 = scmp.ne.s32.totalorder %s283, %s285
      %p289 = scmp.eq.s32.totalorder %s39, 0
      %p290 = por %p288, %p289
      %p291 = scmp.ne.s32.totalorder %s283, %s285
      %p292 = scmp.eq.s32.totalorder %s44, 1
      %p293 = por %p291, %p292
      %p294 = scmp.ne.s32.totalorder %s285, %s286
      %p295 = scmp.eq.s32.totalorder %s44, 0
      %p296 = por %p294, %p295
      %p297 = scmp.ne.s32.totalorder %s285, %s286
      %p298 = scmp.eq.s32.totalorder %s45, 1
      %p299 = por %p297, %p298
      %p301 = scmp.ne.s32.totalorder %s286, %s300
      %p302 = scmp.eq.s32.totalorder %s45, 0
      %p303 = por %p301, %p302
      %s305 = sadd.s32 %s304, 1
      %p308 = scmp.eq.s32.totalorder %s39, 1
      %p309 = scmp.ne.s32.totalorder %s304, %s306
      %p310 = scmp.eq.s32.totalorder %s39, 0
      %p311 = por %p309, %p310
      %p312 = scmp.ne.s32.totalorder %s304, %s306
      %p313 = scmp.eq.s32.totalorder %s44, 1
      %p314 = por %p312, %p313
      %p315 = scmp.ne.s32.totalorder %s306, %s307
      %p316 = scmp.eq.s32.totalorder %s44, 0
      %p317 = por %p315, %p316
      %p318 = scmp.ne.s32.totalorder %s306, %s307
      %p319 = scmp.eq.s32.totalorder %s45, 1
      %p320 = por %p318, %p319
      %p322 = scmp.ne.s32.totalorder %s307, %s321
      %p323 = scmp.eq.s32.totalorder %s45, 0
      %p324 = por %p322, %p323
      %s326 = sadd.s32 %s325, 1
      %p329 = scmp.eq.s32.totalorder %s39, 1
      %p330 = scmp.ne.s32.totalorder %s325, %s327
      %p331 = scmp.eq.s32.totalorder %s39, 0
      %p332 = por %p330, %p331
      %p333 = scmp.ne.s32.totalorder %s325, %s327
      %p334 = scmp.eq.s32.totalorder %s44, 1
      %p335 = por %p333, %p334
      %p336 = scmp.ne.s32.totalorder %s327, %s328
      %p337 = scmp.eq.s32.totalorder %s44, 0
      %p338 = por %p336, %p337
      %p339 = scmp.ne.s32.totalorder %s327, %s328
      %p340 = scmp.eq.s32.totalorder %s45, 1
      %p341 = por %p339, %p340
      %p343 = scmp.ne.s32.totalorder %s328, %s342
      %p344 = scmp.eq.s32.totalorder %s45, 0
      %p345 = por %p343, %p344
      %s347 = sadd.s32 %s346, 1
      %p350 = scmp.eq.s32.totalorder %s39, 1
      %p351 = scmp.ne.s32.totalorder %s346, %s348
      %p352 = scmp.eq.s32.totalorder %s39, 0
      %p353 = por %p351, %p352
      %p354 = scmp.ne.s32.totalorder %s346, %s348
      %p355 = scmp.eq.s32.totalorder %s44, 1
      %p356 = por %p354, %p355
      %p357 = scmp.ne.s32.totalorder %s348, %s349
      %p358 = scmp.eq.s32.totalorder %s44, 0
      %p359 = por %p357, %p358
      %p360 = scmp.ne.s32.totalorder %s348, %s349
      %p361 = scmp.eq.s32.totalorder %s45, 1
      %p362 = por %p360, %p361
      %p364 = scmp.ne.s32.totalorder %s349, %s363
      %p365 = scmp.eq.s32.totalorder %s45, 0
      %p366 = por %p364, %p365
      %s368 = sadd.s32 %s367, 1
      %p371 = scmp.eq.s32.totalorder %s39, 1
      %p372 = scmp.ne.s32.totalorder %s367, %s369
      %p373 = scmp.eq.s32.totalorder %s39, 0
      %p374 = por %p372, %p373
      %p375 = scmp.ne.s32.totalorder %s367, %s369
      %p376 = scmp.eq.s32.totalorder %s44, 1
      %p377 = por %p375, %p376
      %p378 = scmp.ne.s32.totalorder %s369, %s370
      %p379 = scmp.eq.s32.totalorder %s44, 0
      %p380 = por %p378, %p379
      %p381 = scmp.ne.s32.totalorder %s369, %s370
      %p382 = scmp.eq.s32.totalorder %s45, 1
      %p383 = por %p381, %p382
      %p385 = scmp.ne.s32.totalorder %s370, %s384
      %p386 = scmp.eq.s32.totalorder %s45, 0
      %p387 = por %p385, %p386
      %s389 = sadd.s32 %s388, 1
      %p392 = scmp.eq.s32.totalorder %s39, 1
      %p393 = scmp.ne.s32.totalorder %s388, %s390
      %p394 = scmp.eq.s32.totalorder %s39, 0
      %p395 = por %p393, %p394
      %p396 = scmp.ne.s32.totalorder %s388, %s390
      %p397 = scmp.eq.s32.totalorder %s44, 1
      %p398 = por %p396, %p397
      %p399 = scmp.ne.s32.totalorder %s390, %s391
      %p400 = scmp.eq.s32.totalorder %s44, 0
      %p401 = por %p399, %p400
      %p402 = scmp.ne.s32.totalorder %s390, %s391
      %p403 = scmp.eq.s32.totalorder %s45, 1
      %p404 = por %p402, %p403
      %p406 = scmp.ne.s32.totalorder %s391, %s405
      %p407 = scmp.eq.s32.totalorder %s45, 0
      %p408 = por %p406, %p407
      %s410 = sadd.s32 %s409, 1
      %p413 = scmp.eq.s32.totalorder %s39, 1
      %p414 = scmp.ne.s32.totalorder %s409, %s411
      %p415 = scmp.eq.s32.totalorder %s39, 0
      %p416 = por %p414, %p415
      %p417 = scmp.ne.s32.totalorder %s409, %s411
      %p418 = scmp.eq.s32.totalorder %s44, 1
      %p419 = por %p417, %p418
      %p420 = scmp.ne.s32.totalorder %s411, %s412
      %p421 = scmp.eq.s32.totalorder %s44, 0
      %p422 = por %p420, %p421
      %p423 = scmp.ne.s32.totalorder %s411, %s412
      %p424 = scmp.eq.s32.totalorder %s45, 1
      %p425 = por %p423, %p424
      %p427 = scmp.ne.s32.totalorder %s412, %s426
      %p428 = scmp.eq.s32.totalorder %s45, 0
      %p429 = por %p427, %p428
      %s431 = sadd.s32 %s430, 1
      %p434 = scmp.eq.s32.totalorder %s39, 1
      %p435 = scmp.ne.s32.totalorder %s430, %s432
      %p436 = scmp.eq.s32.totalorder %s39, 0
      %p437 = por %p435, %p436
      %p438 = scmp.ne.s32.totalorder %s430, %s432
      %p439 = scmp.eq.s32.totalorder %s44, 1
      %p440 = por %p438, %p439
      %p441 = scmp.ne.s32.totalorder %s432, %s433
      %p442 = scmp.eq.s32.totalorder %s44, 0
      %p443 = por %p441, %p442
      %p444 = scmp.ne.s32.totalorder %s432, %s433
      %p445 = scmp.eq.s32.totalorder %s45, 1
      %p446 = por %p444, %p445
      %p448 = scmp.ne.s32.totalorder %s433, %s447
      %p449 = scmp.eq.s32.totalorder %s45, 0
      %p450 = por %p448, %p449
      %s451 = ssub.s32 %s39, %s46
      %p452 = scmp.eq.s32.totalorder %s451, 0
      %s454 = sadd.s32 %s453, 1
      %s455 = scalar_select %p452, %s453, %s454
      %p458 = pneg %p452
      %p459 = scmp.eq.s32.totalorder %s39, 1
      %p460 = por %p458, %p459
      %p461 = scmp.ne.s32.totalorder %s453, %s456
      %p462 = scmp.eq.s32.totalorder %s39, 0
      %p463 = por %p461, %p462
      %p464 = scmp.ne.s32.totalorder %s453, %s456
      %p465 = scmp.eq.s32.totalorder %s44, 1
      %p466 = por %p464, %p465
      %p467 = scmp.ne.s32.totalorder %s456, %s457
      %p468 = scmp.eq.s32.totalorder %s44, 0
      %p469 = por %p467, %p468
      %p470 = scmp.ne.s32.totalorder %s456, %s457
      %p471 = scmp.eq.s32.totalorder %s45, 1
      %p472 = por %p470, %p471
      %p474 = scmp.ne.s32.totalorder %s457, %s473
      %p475 = scmp.eq.s32.totalorder %s45, 0
      %p476 = por %p474, %p475
      %s477 = ssub.s32 %s39, %s46
      %p478 = scmp.eq.s32.totalorder %s477, 0
      %s480 = sadd.s32 %s479, 1
      %s481 = scalar_select %p478, %s479, %s480
      %p484 = pneg %p478
      %p485 = scmp.eq.s32.totalorder %s39, 1
      %p486 = por %p484, %p485
      %p487 = scmp.ne.s32.totalorder %s479, %s482
      %p488 = scmp.eq.s32.totalorder %s39, 0
      %p489 = por %p487, %p488
      %p490 = scmp.ne.s32.totalorder %s479, %s482
      %p491 = scmp.eq.s32.totalorder %s44, 1
      %p492 = por %p490, %p491
      %p493 = scmp.ne.s32.totalorder %s482, %s483
      %p494 = scmp.eq.s32.totalorder %s44, 0
      %p495 = por %p493, %p494
      %p496 = scmp.ne.s32.totalorder %s482, %s483
      %p497 = scmp.eq.s32.totalorder %s45, 1
      %p498 = por %p496, %p497
      %p500 = scmp.ne.s32.totalorder %s483, %s499
      %p501 = scmp.eq.s32.totalorder %s45, 0
      %p502 = por %p500, %p501
      %p503 = scmp.le.s32.totalorder 1, %s39
      %p504 = scmp.lt.s32.totalorder %s39, 3
      %p505 = pnand %p503, %p504
      %p506 = pneg %p505
      // Predicated region
      $region9: #{tpu_custom_call.1} parent=5 // pred_check
        _
      $region10: #{tpu_custom_call.1} parent=5 // pred_check_branch
        %508 = sbr.rel (%p505) target = $region12
      $region11: #{tpu_custom_call.1} parent=5 // pred_region
        %s509 = ssub.s32 %s39, 1
        // Predicated region
        $region13: #{tpu_custom_call.1} parent=11 // pred_check
          %p510 = pneg %p86
        $region14: #{tpu_custom_call.1} parent=11 // pred_check_branch
          %512 = sbr.rel (%p510) target = $region16
        $region15: #{tpu_custom_call.1} parent=11 // pred_region
          _
        $region16: #{tpu_custom_call.1} parent=11 // pred_fallthru
          _
        // Predicated region
        $region17: #{tpu_custom_call.1} parent=11 // pred_check
          %p513 = pneg %p107
        $region18: #{tpu_custom_call.1} parent=11 // pred_check_branch
          %515 = sbr.rel (%p513) target = $region20
        $region19: #{tpu_custom_call.1} parent=11 // pred_region
          %517 = vsyncadd [#allocation3], 0
          %s518 = sshll.u32 %s2, 4
          %s519 = int_to_ptr.hbm [resolvable:$true] %s518
          %s520 = sshll.u32 [#allocation2], 4
          %s521 = int_to_ptr.vmem [resolvable:$true] %s520
          %526 = dma.hbm_to_vmem [thread:$0]  %s519, 384, %s521, [#allocation3], 128, 128, 8
        $region20: #{tpu_custom_call.1} parent=11 // pred_fallthru
          _
        // Predicated region
        $region21: #{tpu_custom_call.1} parent=11 // pred_check
          %p527 = pneg %p128
        $region22: #{tpu_custom_call.1} parent=11 // pred_check_branch
          %529 = sbr.rel (%p527) target = $region24
        $region23: #{tpu_custom_call.1} parent=11 // pred_region
          %531 = vsyncadd [#allocation6], 0
          %s533 = sshll.u32 %s3, 4
          %s534 = int_to_ptr.hbm [resolvable:$true] %s533
          %s535 = sshll.u32 [#allocation5], 4
          %s536 = int_to_ptr.vmem [resolvable:$true] %s535
          %538 = dma.hbm_to_vmem [thread:$0]  %s534, 128, %s536, [#allocation6]
        $region24: #{tpu_custom_call.1} parent=11 // pred_fallthru
          _
        // Predicated region
        $region25: #{tpu_custom_call.1} parent=11 // pred_check
          %p539 = pneg %p149
        $region26: #{tpu_custom_call.1} parent=11 // pred_check_branch
          %541 = sbr.rel (%p539) target = $region28
        $region27: #{tpu_custom_call.1} parent=11 // pred_region
          _
        $region28: #{tpu_custom_call.1} parent=11 // pred_fallthru
          _
        // Predicated region
        $region29: #{tpu_custom_call.1} parent=11 // pred_check
          %p542 = pneg %p170
        $region30: #{tpu_custom_call.1} parent=11 // pred_check_branch
          %544 = sbr.rel (%p542) target = $region32
        $region31: #{tpu_custom_call.1} parent=11 // pred_region
          %546 = vsyncadd [#allocation6], 0
          %s548 = sshll.u32 %s5, 4
          %s549 = int_to_ptr.hbm [resolvable:$true] %s548
          %s550 = sshll.u32 [#allocation7], 4
          %s551 = int_to_ptr.vmem [resolvable:$true] %s550
          %553 = dma.hbm_to_vmem [thread:$0]  %s549, 128, %s551, [#allocation6]
        $region32: #{tpu_custom_call.1} parent=11 // pred_fallthru
          _
        // Predicated region
        $region33: #{tpu_custom_call.1} parent=11 // pred_check
          %p554 = pneg %p191
        $region34: #{tpu_custom_call.1} parent=11 // pred_check_branch
          %556 = sbr.rel (%p554) target = $region36
        $region35: #{tpu_custom_call.1} parent=11 // pred_region
          %558 = vsyncadd [#allocation9], 0
          %s560 = sshll.u32 %s6, 4
          %s561 = int_to_ptr.hbm [resolvable:$true] %s560
          %s562 = sshll.u32 [#allocation8], 4
          %s563 = int_to_ptr.vmem [resolvable:$true] %s562
          %565 = dma.hbm_to_vmem [thread:$0]  %s561, 16, %s563, [#allocation9]
        $region36: #{tpu_custom_call.1} parent=11 // pred_fallthru
          _
        // Predicated region
        $region37: #{tpu_custom_call.1} parent=11 // pred_check
          %p566 = pneg %p212
        $region38: #{tpu_custom_call.1} parent=11 // pred_check_branch
          %568 = sbr.rel (%p566) target = $region40
        $region39: #{tpu_custom_call.1} parent=11 // pred_region
          %570 = vsyncadd [#allocation9], 0
          %s571 = sshll.u32 %s7, 4
          %s572 = int_to_ptr.hbm [resolvable:$true] %s571
          %s573 = sshll.u32 [#allocation10], 4
          %s574 = int_to_ptr.vmem [resolvable:$true] %s573
          %579 = dma.hbm_to_vmem [thread:$0]  %s572, 384, %s574, [#allocation9], 128, 128, 8
        $region40: #{tpu_custom_call.1} parent=11 // pred_fallthru
          _
        // Predicated region
        $region41: #{tpu_custom_call.1} parent=11 // pred_check
          %p580 = pneg %p233
        $region42: #{tpu_custom_call.1} parent=11 // pred_check_branch
          %582 = sbr.rel (%p580) target = $region44
        $region43: #{tpu_custom_call.1} parent=11 // pred_region
          %584 = vsyncadd [#allocation12], 0
          %s585 = sshll.u32 %s8, 4
          %s586 = int_to_ptr.hbm [resolvable:$true] %s585
          %s587 = sshll.u32 [#allocation11], 4
          %s588 = int_to_ptr.vmem [resolvable:$true] %s587
          %593 = dma.hbm_to_vmem [thread:$0]  %s586, 384, %s588, [#allocation12], 128, 128, 8
        $region44: #{tpu_custom_call.1} parent=11 // pred_fallthru
          _
        // Predicated region
        $region45: #{tpu_custom_call.1} parent=11 // pred_check
          %p594 = pneg %p254
        $region46: #{tpu_custom_call.1} parent=11 // pred_check_branch
          %596 = sbr.rel (%p594) target = $region48
        $region47: #{tpu_custom_call.1} parent=11 // pred_region
          _
        $region48: #{tpu_custom_call.1} parent=11 // pred_fallthru
          _
        // Predicated region
        $region49: #{tpu_custom_call.1} parent=11 // pred_check
          %p597 = pneg %p275
        $region50: #{tpu_custom_call.1} parent=11 // pred_check_branch
          %599 = sbr.rel (%p597) target = $region52
        $region51: #{tpu_custom_call.1} parent=11 // pred_region
          _
        $region52: #{tpu_custom_call.1} parent=11 // pred_fallthru
          _
        // Predicated region
        $region53: #{tpu_custom_call.1} parent=11 // pred_check
          %p600 = pneg %p296
        $region54: #{tpu_custom_call.1} parent=11 // pred_check_branch
          %602 = sbr.rel (%p600) target = $region56
        $region55: #{tpu_custom_call.1} parent=11 // pred_region
          %604 = vsyncadd [#allocation12], 0
          %s606 = sshll.u32 %s11, 4
          %s607 = int_to_ptr.hbm [resolvable:$true] %s606
          %s608 = sshll.u32 [#allocation13], 4
          %s609 = int_to_ptr.vmem [resolvable:$true] %s608
          %611 = dma.hbm_to_vmem [thread:$0]  %s607, 128, %s609, [#allocation12]
        $region56: #{tpu_custom_call.1} parent=11 // pred_fallthru
          _
        // Predicated region
        $region57: #{tpu_custom_call.1} parent=11 // pred_check
          %p612 = pneg %p317
        $region58: #{tpu_custom_call.1} parent=11 // pred_check_branch
          %614 = sbr.rel (%p612) target = $region60
        $region59: #{tpu_custom_call.1} parent=11 // pred_region
          _
        $region60: #{tpu_custom_call.1} parent=11 // pred_fallthru
          _
        // Predicated region
        $region61: #{tpu_custom_call.1} parent=11 // pred_check
          %p615 = pneg %p338
        $region62: #{tpu_custom_call.1} parent=11 // pred_check_branch
          %617 = sbr.rel (%p615) target = $region64
        $region63: #{tpu_custom_call.1} parent=11 // pred_region
          %619 = vsyncadd [#allocation15], 0
          %s620 = sshll.u32 %s13, 4
          %s621 = int_to_ptr.hbm [resolvable:$true] %s620
          %s622 = sshll.u32 [#allocation14], 4
          %s623 = int_to_ptr.vmem [resolvable:$true] %s622
          %628 = dma.hbm_to_vmem [thread:$0]  %s621, 384, %s623, [#allocation15], 128, 128, 8
        $region64: #{tpu_custom_call.1} parent=11 // pred_fallthru
          _
        // Predicated region
        $region65: #{tpu_custom_call.1} parent=11 // pred_check
          %p629 = pneg %p359
        $region66: #{tpu_custom_call.1} parent=11 // pred_check_branch
          %631 = sbr.rel (%p629) target = $region68
        $region67: #{tpu_custom_call.1} parent=11 // pred_region
          %633 = vsyncadd [#allocation15], 0
          %s634 = sshll.u32 %s14, 4
          %s635 = int_to_ptr.hbm [resolvable:$true] %s634
          %s636 = sshll.u32 [#allocation16], 4
          %s637 = int_to_ptr.vmem [resolvable:$true] %s636
          %642 = dma.hbm_to_vmem [thread:$0]  %s635, 384, %s637, [#allocation15], 128, 128, 8
        $region68: #{tpu_custom_call.1} parent=11 // pred_fallthru
          _
        // Predicated region
        $region69: #{tpu_custom_call.1} parent=11 // pred_check
          %p643 = pneg %p380
        $region70: #{tpu_custom_call.1} parent=11 // pred_check_branch
          %645 = sbr.rel (%p643) target = $region72
        $region71: #{tpu_custom_call.1} parent=11 // pred_region
          %647 = vsyncadd [#allocation18], 0
          %s649 = sshll.u32 %s15, 4
          %s650 = int_to_ptr.hbm [resolvable:$true] %s649
          %s651 = sshll.u32 [#allocation17], 4
          %s652 = int_to_ptr.vmem [resolvable:$true] %s651
          %654 = dma.hbm_to_vmem [thread:$0]  %s650, 128, %s652, [#allocation18]
        $region72: #{tpu_custom_call.1} parent=11 // pred_fallthru
          _
        // Predicated region
        $region73: #{tpu_custom_call.1} parent=11 // pred_check
          %p655 = pneg %p401
        $region74: #{tpu_custom_call.1} parent=11 // pred_check_branch
          %657 = sbr.rel (%p655) target = $region76
        $region75: #{tpu_custom_call.1} parent=11 // pred_region
          %659 = vsyncadd [#allocation18], 0
          %s660 = sshll.u32 %s16, 4
          %s661 = int_to_ptr.hbm [resolvable:$true] %s660
          %s662 = sshll.u32 [#allocation19], 4
          %s663 = int_to_ptr.vmem [resolvable:$true] %s662
          %668 = dma.hbm_to_vmem [thread:$0]  %s661, 256, %s663, [#allocation18], 128, 128, 8
        $region76: #{tpu_custom_call.1} parent=11 // pred_fallthru
          _
        // Predicated region
        $region77: #{tpu_custom_call.1} parent=11 // pred_check
          %p669 = pneg %p422
        $region78: #{tpu_custom_call.1} parent=11 // pred_check_branch
          %671 = sbr.rel (%p669) target = $region80
        $region79: #{tpu_custom_call.1} parent=11 // pred_region
          _
        $region80: #{tpu_custom_call.1} parent=11 // pred_fallthru
          _
        // Predicated region
        $region81: #{tpu_custom_call.1} parent=11 // pred_check
          %p672 = pneg %p443
        $region82: #{tpu_custom_call.1} parent=11 // pred_check_branch
          %674 = sbr.rel (%p672) target = $region84
        $region83: #{tpu_custom_call.1} parent=11 // pred_region
          _
        $region84: #{tpu_custom_call.1} parent=11 // pred_fallthru
          _
      $region12: #{tpu_custom_call.1} parent=5 // pred_fallthru
        _
      %p675 = scmp.lt.s32.totalorder %s39, 2
      // Predicated region
      $region85: #{tpu_custom_call.1} parent=5 // pred_check
        %p676 = pneg %p675
      $region86: #{tpu_custom_call.1} parent=5 // pred_check_branch
        %678 = sbr.rel (%p676) target = $region88
      $region87: #{tpu_custom_call.1} parent=5 // pred_region
        // Predicated region
        $region89: #{tpu_custom_call.1} parent=87 // pred_check
          %p679 = pneg %p59
        $region90: #{tpu_custom_call.1} parent=87 // pred_check_branch
          %681 = sbr.rel (%p679) target = $region92
        $region91: #{tpu_custom_call.1} parent=87 // pred_region
          %s682 = smul.u32 2, %s39
          %p683 = scmp.lt.s32.totalorder %s682, 3
          %s684 = scalar_select %p683, %s682, 3
          %s685 = smul.addr %s684, 8
          %s686 = scalar_lea.vmem %s0, %s685
          %s687 = smul.u32 2, %s39
        $region92: #{tpu_custom_call.1} parent=87 // pred_fallthru
          _
      $region88: #{tpu_custom_call.1} parent=5 // pred_fallthru
        _
      %p688 = scmp.le.s32.totalorder 1, %s39
      %p689 = scmp.lt.s32.totalorder %s39, 3
      %p690 = pnand %p688, %p689
      %p691 = pneg %p690
      // Predicated region
      $region93: #{tpu_custom_call.1} parent=5 // pred_check
        _
      $region94: #{tpu_custom_call.1} parent=5 // pred_check_branch
        %693 = sbr.rel (%p690) target = $region96
      $region95: #{tpu_custom_call.1} parent=5 // pred_region
        %s694 = ssub.s32 %s39, 1
        // Predicated region
        $region97: #{tpu_custom_call.1} parent=95 // pred_check
          %p695 = pneg %p107
        $region98: #{tpu_custom_call.1} parent=95 // pred_check_branch
          %697 = sbr.rel (%p695) target = $region100
        $region99: #{tpu_custom_call.1} parent=95 // pred_region
          %699 = dma.done [#allocation3], 384
        $region100: #{tpu_custom_call.1} parent=95 // pred_fallthru
          _
        // Predicated region
        $region101: #{tpu_custom_call.1} parent=95 // pred_check
          %p700 = pneg %p128
        $region102: #{tpu_custom_call.1} parent=95 // pred_check_branch
          %702 = sbr.rel (%p700) target = $region104
        $region103: #{tpu_custom_call.1} parent=95 // pred_region
          %704 = dma.done [#allocation6], 128
        $region104: #{tpu_custom_call.1} parent=95 // pred_fallthru
          _
        // Predicated region
        $region105: #{tpu_custom_call.1} parent=95 // pred_check
          %p705 = pneg %p170
        $region106: #{tpu_custom_call.1} parent=95 // pred_check_branch
          %707 = sbr.rel (%p705) target = $region108
        $region107: #{tpu_custom_call.1} parent=95 // pred_region
          %709 = dma.done [#allocation6], 128
        $region108: #{tpu_custom_call.1} parent=95 // pred_fallthru
          _
        // Predicated region
        $region109: #{tpu_custom_call.1} parent=95 // pred_check
          %p710 = pneg %p191
        $region110: #{tpu_custom_call.1} parent=95 // pred_check_branch
          %712 = sbr.rel (%p710) target = $region112
        $region111: #{tpu_custom_call.1} parent=95 // pred_region
          %714 = dma.done [#allocation9], 16
        $region112: #{tpu_custom_call.1} parent=95 // pred_fallthru
          _
        // Predicated region
        $region113: #{tpu_custom_call.1} parent=95 // pred_check
          %p715 = pneg %p212
        $region114: #{tpu_custom_call.1} parent=95 // pred_check_branch
          %717 = sbr.rel (%p715) target = $region116
        $region115: #{tpu_custom_call.1} parent=95 // pred_region
          %719 = dma.done [#allocation9], 384
        $region116: #{tpu_custom_call.1} parent=95 // pred_fallthru
          _
        // Predicated region
        $region117: #{tpu_custom_call.1} parent=95 // pred_check
          %p720 = pneg %p233
        $region118: #{tpu_custom_call.1} parent=95 // pred_check_branch
          %722 = sbr.rel (%p720) target = $region120
        $region119: #{tpu_custom_call.1} parent=95 // pred_region
          %724 = dma.done [#allocation12], 384
        $region120: #{tpu_custom_call.1} parent=95 // pred_fallthru
          _
        // Predicated region
        $region121: #{tpu_custom_call.1} parent=95 // pred_check
          %p725 = pneg %p296
        $region122: #{tpu_custom_call.1} parent=95 // pred_check_branch
          %727 = sbr.rel (%p725) target = $region124
        $region123: #{tpu_custom_call.1} parent=95 // pred_region
          %729 = dma.done [#allocation12], 128
        $region124: #{tpu_custom_call.1} parent=95 // pred_fallthru
          _
        // Predicated region
        $region125: #{tpu_custom_call.1} parent=95 // pred_check
          %p730 = pneg %p338
        $region126: #{tpu_custom_call.1} parent=95 // pred_check_branch
          %732 = sbr.rel (%p730) target = $region128
        $region127: #{tpu_custom_call.1} parent=95 // pred_region
          %734 = dma.done [#allocation15], 384
        $region128: #{tpu_custom_call.1} parent=95 // pred_fallthru
          _
        // Predicated region
        $region129: #{tpu_custom_call.1} parent=95 // pred_check
          %p735 = pneg %p359
        $region130: #{tpu_custom_call.1} parent=95 // pred_check_branch
          %737 = sbr.rel (%p735) target = $region132
        $region131: #{tpu_custom_call.1} parent=95 // pred_region
          %739 = dma.done [#allocation15], 384
        $region132: #{tpu_custom_call.1} parent=95 // pred_fallthru
          _
        // Predicated region
        $region133: #{tpu_custom_call.1} parent=95 // pred_check
          %p740 = pneg %p380
        $region134: #{tpu_custom_call.1} parent=95 // pred_check_branch
          %742 = sbr.rel (%p740) target = $region136
        $region135: #{tpu_custom_call.1} parent=95 // pred_region
          %744 = dma.done [#allocation18], 128
        $region136: #{tpu_custom_call.1} parent=95 // pred_fallthru
          _
        // Predicated region
        $region137: #{tpu_custom_call.1} parent=95 // pred_check
          %p745 = pneg %p401
        $region138: #{tpu_custom_call.1} parent=95 // pred_check_branch
          %747 = sbr.rel (%p745) target = $region140
        $region139: #{tpu_custom_call.1} parent=95 // pred_region
          %749 = dma.done [#allocation18], 256
        $region140: #{tpu_custom_call.1} parent=95 // pred_fallthru
          _
        %s750 = smul.u32 2, %s44
        %p751 = scmp.lt.s32.totalorder %s750, 3
        %s752 = scalar_select %p751, %s750, 3
        %s753 = smul.addr %s752, 8
        %s754 = scalar_lea.vmem %s0, %s753
        %p755 = pneg %p65
        %p756 = pneg %p62
        %p757 = pneg %p86
        %p758 = pneg %p83
        %p759 = pneg %p107
        %p760 = pneg %p104
        %p761 = pneg %p128
        %p762 = pneg %p125
        %p763 = pneg %p149
        %p764 = pneg %p146
        %p765 = pneg %p170
        %p766 = pneg %p167
        %p767 = pneg %p191
        %p768 = pneg %p188
        %p769 = pneg %p212
        %p770 = pneg %p209
        %p771 = pneg %p233
        %p772 = pneg %p230
        %p773 = pneg %p254
        %p774 = pneg %p251
        %p775 = pneg %p275
        %p776 = pneg %p272
        %p777 = pneg %p296
        %p778 = pneg %p293
        %p779 = pneg %p317
        %p780 = pneg %p314
        %p781 = pneg %p338
        %p782 = pneg %p335
        %p783 = pneg %p359
        %p784 = pneg %p356
        %p785 = pneg %p380
        %p786 = pneg %p377
        %p787 = pneg %p401
        %p788 = pneg %p398
        %p789 = pneg %p422
        %p790 = pneg %p419
        %p791 = pneg %p443
        %p792 = pneg %p440
        %p793 = pneg %p469
        %p794 = pneg %p466
        %s795 = sand.u32 %s456, 1
        %s796 = scalar_lea.sflag [#allocation4], %s795
        %s797 = sand.u32 %s456, 1
        %s798 = smul.addr %s797, 8
        %s799 = scalar_lea.vmem [#allocation20], %s798
        %p800 = pneg %p495
        %p801 = pneg %p492
        %s802 = sand.u32 %s482, 1
        %s803 = scalar_lea.sflag [#allocation22], %s802
        %s804 = sand.u32 %s482, 1
        %s805 = smul.addr %s804, 8
        %s806 = scalar_lea.vmem [#allocation21], %s805
        %s807 = smul.u32 2, %s44
        %p808 = scmp.lt.s32.totalorder %s807, 3
        %s809 = scalar_select %p808, %s807, 3
        %s810 = smul.addr %s809, 8
        %s811 = scalar_lea.vmem %s0, %s810
        %s812 = smul.u32 2, %s44
        %s813 = smul.u32 2, %s44
        %s814 = smul.u32 2, %s44
        %v815 = vld [vmem:[%s811] sm:$0xff]
        %v816 = vld [vmem:[%s811 + $0x8] sm:$0xff]
        %v817 = vld [vmem:[%s1] sm:$0xff]
        %v818 = vld [vmem:[%s1 + $0x8] sm:$0xff]
        %v819 = vld [vmem:[%s1 + $0x10] sm:$0xff]
        %v820 = vld [vmem:[#allocation2] sm:$0xff]
        %v821 = vld [vmem:[#allocation2 + $0x8] sm:$0xff]
        %v822 = vld [vmem:[#allocation2 + $0x10] sm:$0xff]
        %v823 = vld [vmem:[#allocation5] sm:$0xff]
        %v824 = vld [vmem:[%s4] sm:$0xff]
        %v825 = vld [vmem:[%s4 + $0x8] sm:$0xff]
        %v826 = vld [vmem:[#allocation7] sm:$0xff]
        %v827 = vld [vmem:[#allocation8] sm:$0x1]
        %830 = vrot.lane.b32.xlu0 %v815, 112
        %v831 = vpop.permute.xlu0 %830
        %832 = vrot.lane.b32.xlu0 %v816, 112
        %v833 = vpop.permute.xlu0 %832
        %vm834 = vcmask 195584
        %v835 = vsel %vm834, %v831, 0
        %v837 = vsel %vm834, %v833, 0
        %839 = vmatpush.msra.mxu0 0.0
        %840 = vmatpush.msra.mxu0 0.0
        %841 = vmatpush.msra.mxu0 0.0
        %842 = vmatpush.msra.mxu0 0.0
        %843 = vmatpush.msra.mxu0 0.0
        %844 = vmatpush.msra.mxu0 0.0
        %845 = vmatpush.msra.mxu0 0.0
        %846 = vmatpush.msra.mxu0 0.0
        %847 = vmatpush.msra.mxu0 0.0
        %848 = vmatpush.msra.mxu0 0.0
        %849 = vmatpush.msra.mxu0 0.0
        %850 = vmatpush.msra.mxu0 0.0
        %851 = vmatpush.msra.mxu0 0.0
        %852 = vmatpush.msra.mxu0 %v819
        %853 = vmatpush.msra.mxu0 %v818
        %854 = vmatpush.msra.mxu0 %v817
        %855 = vmatmul.f32.gmra.mxu0 %v835
        %v856 = vpop.f32.mrf.mxu0
        %v857 = vadd.f32 0.0, %v856
        %858 = vmatmul.f32.gmra.mxu0 %v837
        %v859 = vpop.f32.mrf.mxu0
        %v860 = vadd.f32 0.0, %v859
        %861 = vdwg.mxu0
        %v862 = vmul.f32 %v857, %v857
        %v863 = vmul.f32 %v860, %v860
        %866 = vrot.lane.b32.xlu0 %v862, 120
        %v867 = vpop.permute.xlu0 %866
        %868 = vrot.lane.b32.xlu0 %v863, 120
        %v869 = vpop.permute.xlu0 %868
        %v872 = vadd.f32 %v862, %v867
        %v873 = vadd.f32 %v863, %v869
        %874 = vrot.lane.b32.xlu0 %v862, 112
        %v875 = vpop.permute.xlu0 %874
        %876 = vrot.lane.b32.xlu0 %v863, 112
        %v877 = vpop.permute.xlu0 %876
        %v880 = vadd.f32 %v872, %v875
        %v881 = vadd.f32 %v873, %v877
        %v882 = vrsqrt.pop %v880
        %v883 = vmul.f32 %v882, %v880
        %v884 = vmul.f32 %v883, %v882
        %v885 = vmul.f32 0.5, %v884
        %v886 = vsub.f32 1.5, %v885
        %v887 = vmul.f32 %v882, %v886
        %v888 = vmul.f32 %v880, %v887
        %vm889 = vcmp.eq.f32.partialorder %v880, inf
        %v890 = vsel %vm889, %v880, %v888
        %vm891 = vcmp.eq.f32.partialorder %v880, 0.0
        %v892 = vand.u32 %v880, 2147483648
        %v893 = vsel %vm891, %v892, %v890
        %v894 = vrsqrt.pop %v881
        %v895 = vmul.f32 %v894, %v881
        %v896 = vmul.f32 %v895, %v894
        %v897 = vmul.f32 0.5, %v896
        %v898 = vsub.f32 1.5, %v897
        %v899 = vmul.f32 %v894, %v898
        %v900 = vmul.f32 %v881, %v899
        %vm901 = vcmp.eq.f32.partialorder %v881, inf
        %v902 = vsel %vm901, %v881, %v900
        %vm903 = vcmp.eq.f32.partialorder %v881, 0.0
        %v904 = vand.u32 %v881, 2147483648
        %v905 = vsel %vm903, %v904, %v902
        %vm906 = vcmask 130048
        %v907 = vsel %vm906, %v815, 0
        %v909 = vsel %vm906, %v816, 0
        %911 = vmatpush.msra.mxu0 0.0
        %912 = vmatpush.msra.mxu0 0.0
        %913 = vmatpush.msra.mxu0 0.0
        %914 = vmatpush.msra.mxu0 0.0
        %915 = vmatpush.msra.mxu0 0.0
        %916 = vmatpush.msra.mxu0 0.0
        %917 = vmatpush.msra.mxu0 0.0
        %918 = vmatpush.msra.mxu0 0.0
        %919 = vmatpush.msra.mxu0 0.0
        %920 = vmatpush.msra.mxu0 0.0
        %921 = vmatpush.msra.mxu0 0.0
        %922 = vmatpush.msra.mxu0 0.0
        %923 = vmatpush.msra.mxu0 0.0
        %924 = vmatpush.msra.mxu0 0.0
        %925 = vmatpush.msra.mxu0 %v825
        %926 = vmatpush.msra.mxu0 %v824
        %927 = vmatmul.f32.gmra.mxu0 %v907
        %v928 = vpop.f32.mrf.mxu0
        %v929 = vadd.f32 0.0, %v928
        %930 = vmatmul.f32.gmra.mxu0 %v909
        %v931 = vpop.f32.mrf.mxu0
        %v932 = vadd.f32 0.0, %v931
        %933 = vdwg.mxu0
        %vm934 = vcmask 64512
        %v936 = vsel %vm934, %v893, 0
        %v939 = vsel %vm934, %v905, 0
        %941 = vmatpush.msra.mxu0 0.0
        %942 = vmatpush.msra.mxu0 0.0
        %943 = vmatpush.msra.mxu0 0.0
        %944 = vmatpush.msra.mxu0 0.0
        %945 = vmatpush.msra.mxu0 0.0
        %946 = vmatpush.msra.mxu0 0.0
        %947 = vmatpush.msra.mxu0 0.0
        %948 = vmatpush.msra.mxu0 0.0
        %949 = vmatpush.msra.mxu0 0.0
        %950 = vmatpush.msra.mxu0 0.0
        %951 = vmatpush.msra.mxu0 0.0
        %952 = vmatpush.msra.mxu0 0.0
        %953 = vmatpush.msra.mxu0 0.0
        %954 = vmatpush.msra.mxu0 0.0
        %955 = vmatpush.msra.mxu0 0.0
        %956 = vmatpush.msra.mxu0 %v823
        %957 = vmatmul.f32.gmra.mxu0 %v936
        %v958 = vpop.f32.mrf.mxu0
        %v959 = vadd.f32 %v929, %v958
        %960 = vmatmul.f32.gmra.mxu0 %v939
        %v961 = vpop.f32.mrf.mxu0
        %v962 = vadd.f32 %v932, %v961
        %963 = vdwg.mxu0
        %v965 = vperm.slane %v827, 0
        %v968 = vsel %vm934, %v959, 0
        %v971 = vsel %vm934, %v962, 0
        %973 = vmatpush.msra.mxu0 0.0
        %974 = vmatpush.msra.mxu0 0.0
        %975 = vmatpush.msra.mxu0 0.0
        %976 = vmatpush.msra.mxu0 0.0
        %977 = vmatpush.msra.mxu0 0.0
        %978 = vmatpush.msra.mxu0 0.0
        %979 = vmatpush.msra.mxu0 0.0
        %980 = vmatpush.msra.mxu0 0.0
        %981 = vmatpush.msra.mxu0 0.0
        %982 = vmatpush.msra.mxu0 0.0
        %983 = vmatpush.msra.mxu0 0.0
        %984 = vmatpush.msra.mxu0 0.0
        %985 = vmatpush.msra.mxu0 0.0
        %986 = vmatpush.msra.mxu0 0.0
        %987 = vmatpush.msra.mxu0 0.0
        %988 = vmatpush.msra.mxu0 %v826
        %989 = vmatmul.f32.gmra.mxu0 %v968
        %v990 = vpop.f32.mrf.mxu0
        %v991 = vadd.f32 %v965, %v990
        %992 = vmatmul.f32.gmra.mxu0 %v971
        %v993 = vpop.f32.mrf.mxu0
        %v994 = vadd.f32 %v965, %v993
        %995 = vdwg.mxu0
        %v996 = vxor.u32 %v991, 2147483648
        %v997 = vxor.u32 %v994, 2147483648
        %v998 = vmul.f32 %v996, 1.442695
        %v999 = vpow.pop %v998
        %v1000 = vmul.f32 %v997, 1.442695
        %v1001 = vpow.pop %v1000
        %v1002 = vadd.f32 %v999, 1.0
        %v1003 = vadd.f32 %v1001, 1.0
        %v1004 = vrcp.pop %v1002
        %v1005 = vmul.f32 %v1002, %v1004
        %v1006 = vsub.f32 1.0, %v1005
        %v1007 = vmul.f32 %v1004, %v1006
        %v1008 = vadd.f32 %v1004, %v1007
        %vm1009 = vweird.f32 %v1002
        %vm1010 = vweird.f32 %v1004
        %vm1011 = vmor %vm1009, %vm1010
        %v1012 = vsel %vm1011, %v1004, %v1008
        %v1013 = vand.u32 2147483647, %v1002
        %vm1014 = vcmp.eq.f32.partialorder %v1013, 8.507059e+37
        %v1015 = vand.u32 %v1002, 2147483648
        %v1016 = vor.u32 1.1754944e-38, %v1015
        %v1017 = vsel %vm1014, %v1016, %v1012
        %v1018 = vmul.f32 1.0, %v1017
        %v1019 = vrcp.pop %v1003
        %v1020 = vmul.f32 %v1003, %v1019
        %v1021 = vsub.f32 1.0, %v1020
        %v1022 = vmul.f32 %v1019, %v1021
        %v1023 = vadd.f32 %v1019, %v1022
        %vm1024 = vweird.f32 %v1003
        %vm1025 = vweird.f32 %v1019
        %vm1026 = vmor %vm1024, %vm1025
        %v1027 = vsel %vm1026, %v1019, %v1023
        %v1028 = vand.u32 2147483647, %v1003
        %vm1029 = vcmp.eq.f32.partialorder %v1028, 8.507059e+37
        %v1030 = vand.u32 %v1003, 2147483648
        %v1031 = vor.u32 1.1754944e-38, %v1030
        %v1032 = vsel %vm1029, %v1031, %v1027
        %v1033 = vmul.f32 1.0, %v1032
        %v1035 = vsel %vm834, %v857, 0
        %v1038 = vsel %vm834, %v860, 0
        %1040 = vmatpush.msra.mxu0 0.0
        %1041 = vmatpush.msra.mxu0 0.0
        %1042 = vmatpush.msra.mxu0 0.0
        %1043 = vmatpush.msra.mxu0 0.0
        %1044 = vmatpush.msra.mxu0 0.0
        %1045 = vmatpush.msra.mxu0 0.0
        %1046 = vmatpush.msra.mxu0 0.0
        %1047 = vmatpush.msra.mxu0 0.0
        %1048 = vmatpush.msra.mxu0 0.0
        %1049 = vmatpush.msra.mxu0 0.0
        %1050 = vmatpush.msra.mxu0 0.0
        %1051 = vmatpush.msra.mxu0 0.0
        %1052 = vmatpush.msra.mxu0 0.0
        %1053 = vmatpush.msra.mxu0 %v822
        %1054 = vmatpush.msra.mxu0 %v821
        %1055 = vmatpush.msra.mxu0 %v820
        %1056 = vmatmul.f32.gmra.mxu0 %v1035
        %v1057 = vpop.f32.mrf.mxu0
        %v1058 = vadd.f32 0.0, %v1057
        %1059 = vmatmul.f32.gmra.mxu0 %v1038
        %v1060 = vpop.f32.mrf.mxu0
        %v1061 = vadd.f32 0.0, %v1060
        %1062 = vdwg.mxu0
        %1065 = vrot.lane.b32.xlu0 %v1018, 8
        %v1066 = vpop.permute.xlu0 %1065
        %1067 = vrot.lane.b32.xlu0 %v1033, 8
        %v1068 = vpop.permute.xlu0 %1067
        %1071 = vrot.lane.b32.xlu0 %v1018, 16
        %v1072 = vpop.permute.xlu0 %1071
        %1073 = vrot.lane.b32.xlu0 %v1033, 16
        %v1074 = vpop.permute.xlu0 %1073
        %v1077 = vsel %vm934, %v1018, %v1066
        %v1078 = vsel %vm934, %v1033, %v1068
        %v1079 = vsel %vm906, %v1077, %v1072
        %v1080 = vsel %vm906, %v1078, %v1074
        %v1081 = vmul.f32 %v1079, %v1058
        %v1082 = vmul.f32 %v1080, %v1061
        %v1083 = vld [vmem:[#allocation10] sm:$0xff]
        %v1084 = vld [vmem:[#allocation10 + $0x8] sm:$0xff]
        %v1085 = vld [vmem:[#allocation10 + $0x10] sm:$0xff]
        %v1086 = vld [vmem:[#allocation11] sm:$0xff]
        %v1087 = vld [vmem:[#allocation11 + $0x8] sm:$0xff]
        %v1088 = vld [vmem:[#allocation11 + $0x10] sm:$0xff]
        %v1089 = vld [vmem:[%s9] sm:$0xff]
        %v1090 = vld [vmem:[%s10] sm:$0xff]
        %v1091 = vld [vmem:[%s10 + $0x8] sm:$0xff]
        %v1092 = vld [vmem:[#allocation13] sm:$0xff]
        %v1093 = vld [vmem:[%s12] sm:$0x1]
        %1094 = vmatpush.msra.mxu0 0.0
        %1095 = vmatpush.msra.mxu0 0.0
        %1096 = vmatpush.msra.mxu0 0.0
        %1097 = vmatpush.msra.mxu0 0.0
        %1098 = vmatpush.msra.mxu0 0.0
        %1099 = vmatpush.msra.mxu0 0.0
        %1100 = vmatpush.msra.mxu0 0.0
        %1101 = vmatpush.msra.mxu0 0.0
        %1102 = vmatpush.msra.mxu0 0.0
        %1103 = vmatpush.msra.mxu0 0.0
        %1104 = vmatpush.msra.mxu0 0.0
        %1105 = vmatpush.msra.mxu0 0.0
        %1106 = vmatpush.msra.mxu0 0.0
        %1107 = vmatpush.msra.mxu0 %v1085
        %1108 = vmatpush.msra.mxu0 %v1084
        %1109 = vmatpush.msra.mxu0 %v1083
        %1110 = vmatmul.f32.gmra.mxu0 %v835
        %v1111 = vpop.f32.mrf.mxu0
        %v1112 = vadd.f32 0.0, %v1111
        %1113 = vmatmul.f32.gmra.mxu0 %v837
        %v1114 = vpop.f32.mrf.mxu0
        %v1115 = vadd.f32 0.0, %v1114
        %1116 = vdwg.mxu0
        %v1117 = vmul.f32 %v1112, %v1112
        %v1118 = vmul.f32 %v1115, %v1115
        %1121 = vrot.lane.b32.xlu0 %v1117, 120
        %v1122 = vpop.permute.xlu0 %1121
        %1123 = vrot.lane.b32.xlu0 %v1118, 120
        %v1124 = vpop.permute.xlu0 %1123
        %v1127 = vadd.f32 %v1117, %v1122
        %v1128 = vadd.f32 %v1118, %v1124
        %1129 = vrot.lane.b32.xlu0 %v1117, 112
        %v1130 = vpop.permute.xlu0 %1129
        %1131 = vrot.lane.b32.xlu0 %v1118, 112
        %v1132 = vpop.permute.xlu0 %1131
        %v1135 = vadd.f32 %v1127, %v1130
        %v1136 = vadd.f32 %v1128, %v1132
        %v1137 = vrsqrt.pop %v1135
        %v1138 = vmul.f32 %v1137, %v1135
        %v1139 = vmul.f32 %v1138, %v1137
        %v1140 = vmul.f32 0.5, %v1139
        %v1141 = vsub.f32 1.5, %v1140
        %v1142 = vmul.f32 %v1137, %v1141
        %v1143 = vmul.f32 %v1135, %v1142
        %vm1144 = vcmp.eq.f32.partialorder %v1135, inf
        %v1145 = vsel %vm1144, %v1135, %v1143
        %vm1146 = vcmp.eq.f32.partialorder %v1135, 0.0
        %v1147 = vand.u32 %v1135, 2147483648
        %v1148 = vsel %vm1146, %v1147, %v1145
        %v1149 = vrsqrt.pop %v1136
        %v1150 = vmul.f32 %v1149, %v1136
        %v1151 = vmul.f32 %v1150, %v1149
        %v1152 = vmul.f32 0.5, %v1151
        %v1153 = vsub.f32 1.5, %v1152
        %v1154 = vmul.f32 %v1149, %v1153
        %v1155 = vmul.f32 %v1136, %v1154
        %vm1156 = vcmp.eq.f32.partialorder %v1136, inf
        %v1157 = vsel %vm1156, %v1136, %v1155
        %vm1158 = vcmp.eq.f32.partialorder %v1136, 0.0
        %v1159 = vand.u32 %v1136, 2147483648
        %v1160 = vsel %vm1158, %v1159, %v1157
        %1161 = vmatpush.msra.mxu0 0.0
        %1162 = vmatpush.msra.mxu0 0.0
        %1163 = vmatpush.msra.mxu0 0.0
        %1164 = vmatpush.msra.mxu0 0.0
        %1165 = vmatpush.msra.mxu0 0.0
        %1166 = vmatpush.msra.mxu0 0.0
        %1167 = vmatpush.msra.mxu0 0.0
        %1168 = vmatpush.msra.mxu0 0.0
        %1169 = vmatpush.msra.mxu0 0.0
        %1170 = vmatpush.msra.mxu0 0.0
        %1171 = vmatpush.msra.mxu0 0.0
        %1172 = vmatpush.msra.mxu0 0.0
        %1173 = vmatpush.msra.mxu0 0.0
        %1174 = vmatpush.msra.mxu0 0.0
        %1175 = vmatpush.msra.mxu0 %v1091
        %1176 = vmatpush.msra.mxu0 %v1090
        %1177 = vmatmul.f32.gmra.mxu0 %v907
        %v1178 = vpop.f32.mrf.mxu0
        %v1179 = vadd.f32 0.0, %v1178
        %1180 = vmatmul.f32.gmra.mxu0 %v909
        %v1181 = vpop.f32.mrf.mxu0
        %v1182 = vadd.f32 0.0, %v1181
        %1183 = vdwg.mxu0
        %v1185 = vsel %vm934, %v1148, 0
        %v1188 = vsel %vm934, %v1160, 0
        %1190 = vmatpush.msra.mxu0 0.0
        %1191 = vmatpush.msra.mxu0 0.0
        %1192 = vmatpush.msra.mxu0 0.0
        %1193 = vmatpush.msra.mxu0 0.0
        %1194 = vmatpush.msra.mxu0 0.0
        %1195 = vmatpush.msra.mxu0 0.0
        %1196 = vmatpush.msra.mxu0 0.0
        %1197 = vmatpush.msra.mxu0 0.0
        %1198 = vmatpush.msra.mxu0 0.0
        %1199 = vmatpush.msra.mxu0 0.0
        %1200 = vmatpush.msra.mxu0 0.0
        %1201 = vmatpush.msra.mxu0 0.0
        %1202 = vmatpush.msra.mxu0 0.0
        %1203 = vmatpush.msra.mxu0 0.0
        %1204 = vmatpush.msra.mxu0 0.0
        %1205 = vmatpush.msra.mxu0 %v1089
        %1206 = vmatmul.f32.gmra.mxu0 %v1185
        %v1207 = vpop.f32.mrf.mxu0
        %v1208 = vadd.f32 %v1179, %v1207
        %1209 = vmatmul.f32.gmra.mxu0 %v1188
        %v1210 = vpop.f32.mrf.mxu0
        %v1211 = vadd.f32 %v1182, %v1210
        %1212 = vdwg.mxu0
        %v1214 = vperm.slane %v1093, 0
        %v1217 = vsel %vm934, %v1208, 0
        %v1220 = vsel %vm934, %v1211, 0
        %1222 = vmatpush.msra.mxu0 0.0
        %1223 = vmatpush.msra.mxu0 0.0
        %1224 = vmatpush.msra.mxu0 0.0
        %1225 = vmatpush.msra.mxu0 0.0
        %1226 = vmatpush.msra.mxu0 0.0
        %1227 = vmatpush.msra.mxu0 0.0
        %1228 = vmatpush.msra.mxu0 0.0
        %1229 = vmatpush.msra.mxu0 0.0
        %1230 = vmatpush.msra.mxu0 0.0
        %1231 = vmatpush.msra.mxu0 0.0
        %1232 = vmatpush.msra.mxu0 0.0
        %1233 = vmatpush.msra.mxu0 0.0
        %1234 = vmatpush.msra.mxu0 0.0
        %1235 = vmatpush.msra.mxu0 0.0
        %1236 = vmatpush.msra.mxu0 0.0
        %1237 = vmatpush.msra.mxu0 %v1092
        %1238 = vmatmul.f32.gmra.mxu0 %v1217
        %v1239 = vpop.f32.mrf.mxu0
        %v1240 = vadd.f32 %v1214, %v1239
        %1241 = vmatmul.f32.gmra.mxu0 %v1220
        %v1242 = vpop.f32.mrf.mxu0
        %v1243 = vadd.f32 %v1214, %v1242
        %1244 = vdwg.mxu0
        %v1245 = vxor.u32 %v1240, 2147483648
        %v1246 = vxor.u32 %v1243, 2147483648
        %v1247 = vmul.f32 %v1245, 1.442695
        %v1248 = vpow.pop %v1247
        %v1249 = vmul.f32 %v1246, 1.442695
        %v1250 = vpow.pop %v1249
        %v1251 = vadd.f32 %v1248, 1.0
        %v1252 = vadd.f32 %v1250, 1.0
        %v1253 = vrcp.pop %v1251
        %v1254 = vmul.f32 %v1251, %v1253
        %v1255 = vsub.f32 1.0, %v1254
        %v1256 = vmul.f32 %v1253, %v1255
        %v1257 = vadd.f32 %v1253, %v1256
        %vm1258 = vweird.f32 %v1251
        %vm1259 = vweird.f32 %v1253
        %vm1260 = vmor %vm1258, %vm1259
        %v1261 = vsel %vm1260, %v1253, %v1257
        %v1262 = vand.u32 2147483647, %v1251
        %vm1263 = vcmp.eq.f32.partialorder %v1262, 8.507059e+37
        %v1264 = vand.u32 %v1251, 2147483648
        %v1265 = vor.u32 1.1754944e-38, %v1264
        %v1266 = vsel %vm1263, %v1265, %v1261
        %v1267 = vmul.f32 1.0, %v1266
        %v1268 = vrcp.pop %v1252
        %v1269 = vmul.f32 %v1252, %v1268
        %v1270 = vsub.f32 1.0, %v1269
        %v1271 = vmul.f32 %v1268, %v1270
        %v1272 = vadd.f32 %v1268, %v1271
        %vm1273 = vweird.f32 %v1252
        %vm1274 = vweird.f32 %v1268
        %vm1275 = vmor %vm1273, %vm1274
        %v1276 = vsel %vm1275, %v1268, %v1272
        %v1277 = vand.u32 2147483647, %v1252
        %vm1278 = vcmp.eq.f32.partialorder %v1277, 8.507059e+37
        %v1279 = vand.u32 %v1252, 2147483648
        %v1280 = vor.u32 1.1754944e-38, %v1279
        %v1281 = vsel %vm1278, %v1280, %v1276
        %v1282 = vmul.f32 1.0, %v1281
        %v1284 = vsel %vm834, %v1112, 0
        %v1287 = vsel %vm834, %v1115, 0
        %1289 = vmatpush.msra.mxu0 0.0
        %1290 = vmatpush.msra.mxu0 0.0
        %1291 = vmatpush.msra.mxu0 0.0
        %1292 = vmatpush.msra.mxu0 0.0
        %1293 = vmatpush.msra.mxu0 0.0
        %1294 = vmatpush.msra.mxu0 0.0
        %1295 = vmatpush.msra.mxu0 0.0
        %1296 = vmatpush.msra.mxu0 0.0
        %1297 = vmatpush.msra.mxu0 0.0
        %1298 = vmatpush.msra.mxu0 0.0
        %1299 = vmatpush.msra.mxu0 0.0
        %1300 = vmatpush.msra.mxu0 0.0
        %1301 = vmatpush.msra.mxu0 0.0
        %1302 = vmatpush.msra.mxu0 %v1088
        %1303 = vmatpush.msra.mxu0 %v1087
        %1304 = vmatpush.msra.mxu0 %v1086
        %1305 = vmatmul.f32.gmra.mxu0 %v1284
        %v1306 = vpop.f32.mrf.mxu0
        %v1307 = vadd.f32 0.0, %v1306
        %1308 = vmatmul.f32.gmra.mxu0 %v1287
        %v1309 = vpop.f32.mrf.mxu0
        %v1310 = vadd.f32 0.0, %v1309
        %1311 = vdwg.mxu0
        %1314 = vrot.lane.b32.xlu0 %v1267, 8
        %v1315 = vpop.permute.xlu0 %1314
        %1316 = vrot.lane.b32.xlu0 %v1282, 8
        %v1317 = vpop.permute.xlu0 %1316
        %1320 = vrot.lane.b32.xlu0 %v1267, 16
        %v1321 = vpop.permute.xlu0 %1320
        %1322 = vrot.lane.b32.xlu0 %v1282, 16
        %v1323 = vpop.permute.xlu0 %1322
        %v1326 = vsel %vm934, %v1267, %v1315
        %v1327 = vsel %vm934, %v1282, %v1317
        %v1328 = vsel %vm906, %v1326, %v1321
        %v1329 = vsel %vm906, %v1327, %v1323
        %v1330 = vmul.f32 %v1328, %v1307
        %v1331 = vmul.f32 %v1329, %v1310
        %v1332 = vld [vmem:[#allocation14] sm:$0xff]
        %v1333 = vld [vmem:[#allocation14 + $0x8] sm:$0xff]
        %v1334 = vld [vmem:[#allocation14 + $0x10] sm:$0xff]
        %v1335 = vld [vmem:[#allocation16] sm:$0xff]
        %v1336 = vld [vmem:[#allocation16 + $0x8] sm:$0xff]
        %v1337 = vld [vmem:[#allocation16 + $0x10] sm:$0xff]
        %v1338 = vld [vmem:[#allocation17] sm:$0xff]
        %v1339 = vld [vmem:[#allocation19] sm:$0xff]
        %v1340 = vld [vmem:[#allocation19 + $0x8] sm:$0xff]
        %v1341 = vld [vmem:[%s17] sm:$0xff]
        %v1342 = vld [vmem:[%s17 + $0x8] sm:$0xff]
        %v1343 = vld [vmem:[%s18] sm:$0x1]
        %1344 = vmatpush.msra.mxu0 0.0
        %1345 = vmatpush.msra.mxu0 0.0
        %1346 = vmatpush.msra.mxu0 0.0
        %1347 = vmatpush.msra.mxu0 0.0
        %1348 = vmatpush.msra.mxu0 0.0
        %1349 = vmatpush.msra.mxu0 0.0
        %1350 = vmatpush.msra.mxu0 0.0
        %1351 = vmatpush.msra.mxu0 0.0
        %1352 = vmatpush.msra.mxu0 0.0
        %1353 = vmatpush.msra.mxu0 0.0
        %1354 = vmatpush.msra.mxu0 0.0
        %1355 = vmatpush.msra.mxu0 0.0
        %1356 = vmatpush.msra.mxu0 0.0
        %1357 = vmatpush.msra.mxu0 %v1334
        %1358 = vmatpush.msra.mxu0 %v1333
        %1359 = vmatpush.msra.mxu0 %v1332
        %1360 = vmatmul.f32.gmra.mxu0 %v835
        %v1361 = vpop.f32.mrf.mxu0
        %v1362 = vadd.f32 0.0, %v1361
        %1363 = vmatmul.f32.gmra.mxu0 %v837
        %v1364 = vpop.f32.mrf.mxu0
        %v1365 = vadd.f32 0.0, %v1364
        %1366 = vdwg.mxu0
        %v1367 = vmul.f32 %v1362, %v1362
        %v1368 = vmul.f32 %v1365, %v1365
        %1371 = vrot.lane.b32.xlu0 %v1367, 120
        %v1372 = vpop.permute.xlu0 %1371
        %1373 = vrot.lane.b32.xlu0 %v1368, 120
        %v1374 = vpop.permute.xlu0 %1373
        %v1377 = vadd.f32 %v1367, %v1372
        %v1378 = vadd.f32 %v1368, %v1374
        %1379 = vrot.lane.b32.xlu0 %v1367, 112
        %v1380 = vpop.permute.xlu0 %1379
        %1381 = vrot.lane.b32.xlu0 %v1368, 112
        %v1382 = vpop.permute.xlu0 %1381
        %v1385 = vadd.f32 %v1377, %v1380
        %v1386 = vadd.f32 %v1378, %v1382
        %v1387 = vrsqrt.pop %v1385
        %v1388 = vmul.f32 %v1387, %v1385
        %v1389 = vmul.f32 %v1388, %v1387
        %v1390 = vmul.f32 0.5, %v1389
        %v1391 = vsub.f32 1.5, %v1390
        %v1392 = vmul.f32 %v1387, %v1391
        %v1393 = vmul.f32 %v1385, %v1392
        %vm1394 = vcmp.eq.f32.partialorder %v1385, inf
        %v1395 = vsel %vm1394, %v1385, %v1393
        %vm1396 = vcmp.eq.f32.partialorder %v1385, 0.0
        %v1397 = vand.u32 %v1385, 2147483648
        %v1398 = vsel %vm1396, %v1397, %v1395
        %v1399 = vrsqrt.pop %v1386
        %v1400 = vmul.f32 %v1399, %v1386
        %v1401 = vmul.f32 %v1400, %v1399
        %v1402 = vmul.f32 0.5, %v1401
        %v1403 = vsub.f32 1.5, %v1402
        %v1404 = vmul.f32 %v1399, %v1403
        %v1405 = vmul.f32 %v1386, %v1404
        %vm1406 = vcmp.eq.f32.partialorder %v1386, inf
        %v1407 = vsel %vm1406, %v1386, %v1405
        %vm1408 = vcmp.eq.f32.partialorder %v1386, 0.0
        %v1409 = vand.u32 %v1386, 2147483648
        %v1410 = vsel %vm1408, %v1409, %v1407
        %1411 = vmatpush.msra.mxu0 0.0
        %1412 = vmatpush.msra.mxu0 0.0
        %1413 = vmatpush.msra.mxu0 0.0
        %1414 = vmatpush.msra.mxu0 0.0
        %1415 = vmatpush.msra.mxu0 0.0
        %1416 = vmatpush.msra.mxu0 0.0
        %1417 = vmatpush.msra.mxu0 0.0
        %1418 = vmatpush.msra.mxu0 0.0
        %1419 = vmatpush.msra.mxu0 0.0
        %1420 = vmatpush.msra.mxu0 0.0
        %1421 = vmatpush.msra.mxu0 0.0
        %1422 = vmatpush.msra.mxu0 0.0
        %1423 = vmatpush.msra.mxu0 0.0
        %1424 = vmatpush.msra.mxu0 0.0
        %1425 = vmatpush.msra.mxu0 %v1340
        %1426 = vmatpush.msra.mxu0 %v1339
        %1427 = vmatmul.f32.gmra.mxu0 %v907
        %v1428 = vpop.f32.mrf.mxu0
        %v1429 = vadd.f32 0.0, %v1428
        %1430 = vmatmul.f32.gmra.mxu0 %v909
        %v1431 = vpop.f32.mrf.mxu0
        %v1432 = vadd.f32 0.0, %v1431
        %1433 = vdwg.mxu0
        %v1435 = vsel %vm934, %v1398, 0
        %v1438 = vsel %vm934, %v1410, 0
        %1440 = vmatpush.msra.mxu0 0.0
        %1441 = vmatpush.msra.mxu0 0.0
        %1442 = vmatpush.msra.mxu0 0.0
        %1443 = vmatpush.msra.mxu0 0.0
        %1444 = vmatpush.msra.mxu0 0.0
        %1445 = vmatpush.msra.mxu0 0.0
        %1446 = vmatpush.msra.mxu0 0.0
        %1447 = vmatpush.msra.mxu0 0.0
        %1448 = vmatpush.msra.mxu0 0.0
        %1449 = vmatpush.msra.mxu0 0.0
        %1450 = vmatpush.msra.mxu0 0.0
        %1451 = vmatpush.msra.mxu0 0.0
        %1452 = vmatpush.msra.mxu0 0.0
        %1453 = vmatpush.msra.mxu0 0.0
        %1454 = vmatpush.msra.mxu0 0.0
        %1455 = vmatpush.msra.mxu0 %v1338
        %1456 = vmatmul.f32.gmra.mxu0 %v1435
        %v1457 = vpop.f32.mrf.mxu0
        %v1458 = vadd.f32 %v1429, %v1457
        %1459 = vmatmul.f32.gmra.mxu0 %v1438
        %v1460 = vpop.f32.mrf.mxu0
        %v1461 = vadd.f32 %v1432, %v1460
        %1462 = vdwg.mxu0
        %v1464 = vperm.slane %v1343, 0
        %v1467 = vsel %vm906, %v1458, 0
        %v1470 = vsel %vm906, %v1461, 0
        %1472 = vmatpush.msra.mxu0 0.0
        %1473 = vmatpush.msra.mxu0 0.0
        %1474 = vmatpush.msra.mxu0 0.0
        %1475 = vmatpush.msra.mxu0 0.0
        %1476 = vmatpush.msra.mxu0 0.0
        %1477 = vmatpush.msra.mxu0 0.0
        %1478 = vmatpush.msra.mxu0 0.0
        %1479 = vmatpush.msra.mxu0 0.0
        %1480 = vmatpush.msra.mxu0 0.0
        %1481 = vmatpush.msra.mxu0 0.0
        %1482 = vmatpush.msra.mxu0 0.0
        %1483 = vmatpush.msra.mxu0 0.0
        %1484 = vmatpush.msra.mxu0 0.0
        %1485 = vmatpush.msra.mxu0 0.0
        %1486 = vmatpush.msra.mxu0 %v1342
        %1487 = vmatpush.msra.mxu0 %v1341
        %1488 = vmatmul.f32.gmra.mxu0 %v1467
        %v1489 = vpop.f32.mrf.mxu0
        %v1490 = vadd.f32 %v1464, %v1489
        %1491 = vmatmul.f32.gmra.mxu0 %v1470
        %v1492 = vpop.f32.mrf.mxu0
        %v1493 = vadd.f32 %v1464, %v1492
        %1494 = vdwg.mxu0
        %v1495 = vxor.u32 %v1490, 2147483648
        %v1496 = vxor.u32 %v1493, 2147483648
        %v1497 = vmul.f32 %v1495, 1.442695
        %v1498 = vpow.pop %v1497
        %v1499 = vmul.f32 %v1496, 1.442695
        %v1500 = vpow.pop %v1499
        %v1501 = vadd.f32 %v1498, 1.0
        %v1502 = vadd.f32 %v1500, 1.0
        %v1503 = vrcp.pop %v1501
        %v1504 = vmul.f32 %v1501, %v1503
        %v1505 = vsub.f32 1.0, %v1504
        %v1506 = vmul.f32 %v1503, %v1505
        %v1507 = vadd.f32 %v1503, %v1506
        %vm1508 = vweird.f32 %v1501
        %vm1509 = vweird.f32 %v1503
        %vm1510 = vmor %vm1508, %vm1509
        %v1511 = vsel %vm1510, %v1503, %v1507
        %v1512 = vand.u32 2147483647, %v1501
        %vm1513 = vcmp.eq.f32.partialorder %v1512, 8.507059e+37
        %v1514 = vand.u32 %v1501, 2147483648
        %v1515 = vor.u32 1.1754944e-38, %v1514
        %v1516 = vsel %vm1513, %v1515, %v1511
        %v1517 = vmul.f32 1.0, %v1516
        %v1518 = vrcp.pop %v1502
        %v1519 = vmul.f32 %v1502, %v1518
        %v1520 = vsub.f32 1.0, %v1519
        %v1521 = vmul.f32 %v1518, %v1520
        %v1522 = vadd.f32 %v1518, %v1521
        %vm1523 = vweird.f32 %v1502
        %vm1524 = vweird.f32 %v1518
        %vm1525 = vmor %vm1523, %vm1524
        %v1526 = vsel %vm1525, %v1518, %v1522
        %v1527 = vand.u32 2147483647, %v1502
        %vm1528 = vcmp.eq.f32.partialorder %v1527, 8.507059e+37
        %v1529 = vand.u32 %v1502, 2147483648
        %v1530 = vor.u32 1.1754944e-38, %v1529
        %v1531 = vsel %vm1528, %v1530, %v1526
        %v1532 = vmul.f32 1.0, %v1531
        %v1534 = vsel %vm834, %v1362, 0
        %v1537 = vsel %vm834, %v1365, 0
        %1539 = vmatpush.msra.mxu0 0.0
        %1540 = vmatpush.msra.mxu0 0.0
        %1541 = vmatpush.msra.mxu0 0.0
        %1542 = vmatpush.msra.mxu0 0.0
        %1543 = vmatpush.msra.mxu0 0.0
        %1544 = vmatpush.msra.mxu0 0.0
        %1545 = vmatpush.msra.mxu0 0.0
        %1546 = vmatpush.msra.mxu0 0.0
        %1547 = vmatpush.msra.mxu0 0.0
        %1548 = vmatpush.msra.mxu0 0.0
        %1549 = vmatpush.msra.mxu0 0.0
        %1550 = vmatpush.msra.mxu0 0.0
        %1551 = vmatpush.msra.mxu0 0.0
        %1552 = vmatpush.msra.mxu0 %v1337
        %1553 = vmatpush.msra.mxu0 %v1336
        %1554 = vmatpush.msra.mxu0 %v1335
        %1555 = vmatmul.f32.gmra.mxu0 %v1534
        %v1556 = vpop.f32.mrf.mxu0
        %v1557 = vadd.f32 0.0, %v1556
        %1558 = vmatmul.f32.gmra.mxu0 %v1537
        %v1559 = vpop.f32.mrf.mxu0
        %v1560 = vadd.f32 0.0, %v1559
        %1561 = vdwg.mxu0
        %1564 = vrot.lane.b32.xlu0 %v1517, 8
        %v1565 = vpop.permute.xlu0 %1564
        %1566 = vrot.lane.b32.xlu0 %v1532, 8
        %v1567 = vpop.permute.xlu0 %1566
        %1570 = vrot.lane.b32.xlu0 %v1517, 16
        %v1571 = vpop.permute.xlu0 %1570
        %1572 = vrot.lane.b32.xlu0 %v1532, 16
        %v1573 = vpop.permute.xlu0 %1572
        %v1576 = vsel %vm934, %v1517, %v1565
        %v1577 = vsel %vm934, %v1532, %v1567
        %v1578 = vsel %vm906, %v1576, %v1571
        %v1579 = vsel %vm906, %v1577, %v1573
        %v1580 = vmul.f32 %v1578, %v1557
        %v1581 = vmul.f32 %v1579, %v1560
        %1584 = vrot.lane.b32.xlu0 %v1081, 8
        %v1585 = vpop.permute.xlu0 %1584
        %1586 = vrot.lane.b32.xlu0 %v1082, 8
        %v1587 = vpop.permute.xlu0 %1586
        %1590 = vrot.lane.b32.xlu0 %v1208, 32
        %v1591 = vpop.permute.xlu0 %1590
        %1592 = vrot.lane.b32.xlu0 %v1211, 32
        %v1593 = vpop.permute.xlu0 %1592
        %1598 = vrot.lane.b32.xlu0 %v1330, 40
        %v1599 = vpop.permute.xlu0 %1598
        %1600 = vrot.lane.b32.xlu0 %v1331, 40
        %v1601 = vpop.permute.xlu0 %1600
        %v1604 = vsel %vm934, %v959, %v1585
        %v1605 = vsel %vm934, %v962, %v1587
        %vm1606 = vcmask 261120
        %v1607 = vsel %vm1606, %v1604, %v1591
        %v1608 = vsel %vm1606, %v1605, %v1593
        %vm1609 = vcmask 326656
        %v1610 = vsel %vm1609, %v1607, %v1599
        %v1611 = vsel %vm1609, %v1608, %v1601
        %v1612 = vpack.c.bf16 %v1610, %v1610
        %v1613 = vpack.c.bf16 %v1611, %v1611
        %vm1614 = vcmask 519168
        %1615 = vst.msk [vmem:[%s799] sm:$0xf] %vm1614, %v1612
        %1616 = vst.msk [vmem:[%s799 + $0x4] sm:$0xf] %vm1614, %v1613
        %1619 = vrot.lane.b32.xlu0 %v1580, 16
        %v1620 = vpop.permute.xlu0 %1619
        %1621 = vrot.lane.b32.xlu0 %v1581, 16
        %v1622 = vpop.permute.xlu0 %1621
        %v1625 = vsel %vm906, %v1458, %v1620
        %v1626 = vsel %vm906, %v1461, %v1622
        %v1627 = vpack.c.bf16 %v1625, %v1625
        %v1628 = vpack.c.bf16 %v1626, %v1626
        %vm1629 = vcmask 322560
        %1630 = vst.msk [vmem:[%s806] sm:$0xf] %vm1629, %v1627
        %1631 = vst.msk [vmem:[%s806 + $0x4] sm:$0xf] %vm1629, %v1628
        %s1632 = sand.u32 %s456, 1
        %s1633 = scalar_lea.sflag [#allocation4], %s1632
        %s1634 = sand.u32 %s456, 1
        %s1635 = smul.addr %s1634, 8
        %s1636 = scalar_lea.vmem [#allocation20], %s1635
        %s1637 = sand.u32 %s482, 1
        %s1638 = scalar_lea.sflag [#allocation22], %s1637
        %s1639 = sand.u32 %s482, 1
        %s1640 = smul.addr %s1639, 8
        %s1641 = scalar_lea.vmem [#allocation21], %s1640
        // Predicated region
        $region141: #{tpu_custom_call.1} parent=95 // pred_check
          %p1642 = pneg %p466
        $region142: #{tpu_custom_call.1} parent=95 // pred_check_branch
          %1644 = sbr.rel (%p1642) target = $region144
        $region143: #{tpu_custom_call.1} parent=95 // pred_region
          %s1645 = smul.u32 2, %s44
          %1647 = vsyncadd %s1633, 0
          %s1648 = smul.addr %s1645, 4
          %s1649 = scalar_lea.hbm %s19, %s1648
          %s1650 = sshll.u32 %s1636, 4
          %s1651 = int_to_ptr.vmem [resolvable:$true] %s1650
          %s1652 = sshll.u32 %s1649, 4
          %s1653 = int_to_ptr.hbm [resolvable:$true] %s1652
          %1658 = dma.vmem_to_hbm [thread:$0]  %s1651, 128, %s1653, %s1633, 64, 64, 4
        $region144: #{tpu_custom_call.1} parent=95 // pred_fallthru
          _
        // Predicated region
        $region145: #{tpu_custom_call.1} parent=95 // pred_check
          %p1659 = pneg %p492
        $region146: #{tpu_custom_call.1} parent=95 // pred_check_branch
          %1661 = sbr.rel (%p1659) target = $region148
        $region147: #{tpu_custom_call.1} parent=95 // pred_region
          %s1662 = smul.u32 2, %s44
          %1664 = vsyncadd %s1638, 0
          %s1665 = smul.addr %s1662, 4
          %s1666 = scalar_lea.hbm %s20, %s1665
          %s1667 = sshll.u32 %s1641, 4
          %s1668 = int_to_ptr.vmem [resolvable:$true] %s1667
          %s1669 = sshll.u32 %s1666, 4
          %s1670 = int_to_ptr.hbm [resolvable:$true] %s1669
          %1675 = dma.vmem_to_hbm [thread:$0]  %s1668, 128, %s1670, %s1638, 64, 64, 4
        $region148: #{tpu_custom_call.1} parent=95 // pred_fallthru
          _
      $region96: #{tpu_custom_call.1} parent=5 // pred_fallthru
        _
      %p1676 = scmp.le.s32.totalorder 2, %s39
      // Predicated region
      $region149: #{tpu_custom_call.1} parent=5 // pred_check
        %p1677 = pneg %p1676
      $region150: #{tpu_custom_call.1} parent=5 // pred_check_branch
        %1679 = sbr.rel (%p1677) target = $region152
      $region151: #{tpu_custom_call.1} parent=5 // pred_region
        %s1680 = ssub.s32 %s39, 2
        // Predicated region
        $region153: #{tpu_custom_call.1} parent=151 // pred_check
          %p1681 = pneg %p472
        $region154: #{tpu_custom_call.1} parent=151 // pred_check_branch
          %1683 = sbr.rel (%p1681) target = $region156
        $region155: #{tpu_custom_call.1} parent=151 // pred_region
          %s1684 = sand.u32 %s457, 1
          %s1685 = scalar_lea.sflag [#allocation4], %s1684
          %s1686 = sand.u32 %s457, 1
          %s1687 = smul.addr %s1686, 8
          %s1688 = scalar_lea.vmem [#allocation20], %s1687
          %1690 = dma.done %s1685, 128
        $region156: #{tpu_custom_call.1} parent=151 // pred_fallthru
          _
        // Predicated region
        $region157: #{tpu_custom_call.1} parent=151 // pred_check
          %p1691 = pneg %p498
        $region158: #{tpu_custom_call.1} parent=151 // pred_check_branch
          %1693 = sbr.rel (%p1691) target = $region160
        $region159: #{tpu_custom_call.1} parent=151 // pred_region
          %s1694 = sand.u32 %s483, 1
          %s1695 = scalar_lea.sflag [#allocation22], %s1694
          %s1696 = sand.u32 %s483, 1
          %s1697 = smul.addr %s1696, 8
          %s1698 = scalar_lea.vmem [#allocation21], %s1697
          %1700 = dma.done %s1695, 128
        $region160: #{tpu_custom_call.1} parent=151 // pred_fallthru
          _
      $region152: #{tpu_custom_call.1} parent=5 // pred_fallthru
        _
    $region6: #{tpu_custom_call.1} parent=1 // loop_footer
      %s43 = sadd.s32 1, %s39
    $region7: #{tpu_custom_call.1} parent=1 // loop_footer_branch
      %38 = sbr.rel target = $region3
    $region8: #{tpu_custom_call.1} parent=1 // loop_exit
      _
    %1701 = vsyncpa [#allocation3], 1
    %s1702 = scalar_lea.sflag [#allocation3], 1
    %1703 = vsyncpa %s1702, 1
    %1704 = vsyncpa [#allocation6], 1
    %1705 = vsyncpa [#allocation9], 1
    %1706 = vsyncpa [#allocation12], 1
    %1707 = vsyncpa [#allocation15], 1
    %1708 = vsyncpa [#allocation18], 1
    %1709 = vsyncpa [#allocation4], 1
    %s1710 = scalar_lea.sflag [#allocation4], 1
    %1711 = vsyncpa %s1710, 1
    %1712 = vsyncpa [#allocation22], 1
    %s1713 = scalar_lea.sflag [#allocation22], 1
    %1714 = vsyncpa %s1713, 1

</llo_original>
